<compile_context>
chip_gen: v6e
topology: v6e:2x2x1
jax: 0.10.0
libtpu: 0.0.40
codegen_flags: <defaults>
</compile_context>

<pallas_src>
import math

import jax
import jax.numpy as jnp
from jax.experimental import pallas as pl
from jax.experimental.pallas import tpu as pltpu


def rpn_head_kernel(x_ref, w1_ref, bias_ref, wh_ref, bh_ref, out_ref):
    """One (batch, row-strip) grid step.

    x_ref   : (3, (TH+2)*W, Cin)  per-dx flattened padded input strips (bf16)
    w1_ref  : (9, Cin, Chid)      3x3 conv weight, BN scale pre-folded,
                                  tap-major ordered [dx*3 + dy]
    bias_ref: (1, Chid)           folded BatchNorm bias (f32)
    wh_ref  : (Chid, Cpad)        fused [obj | bbx] 1x1 weights, zero-padded to
                                  a 128-lane multiple
    bh_ref  : (1, Cpad)           fused biases (f32), zero-padded
    out_ref : (TH*W, Cpad)        lane-dense fused logits (f32)
    """
    n_taps, rows, cin = x_ref.shape
    chid = w1_ref.shape[2]
    thw = out_ref.shape[0]                  # TH * W
    w = (rows - thw) // 2                   # rows = (TH + 2) * W

    # 3x3 conv as 9 (TH*W, Cin) x (Cin, Chid) MXU matmuls with f32 accumulation.
    # All slices are static; row offsets dy*W are 8-aligned when W % 8 == 0.
    acc = jnp.zeros((thw, chid), jnp.float32)
    for dx in range(3):
        for dy in range(3):
            patch = x_ref[dx, dy * w:dy * w + thw, :]          # (TH*W, Cin)
            acc = acc + jnp.dot(patch, w1_ref[3 * dx + dy],
                                preferred_element_type=jnp.float32)

    # Folded BatchNorm bias + leaky_relu(0.01); kept in f32 (no bf16 VPU on v5e).
    y = acc + bias_ref[...]
    y = jnp.where(y > 0, y, jnp.float32(0.01) * y)

    # Fused obj|bbx 1x1 conv: one MXU matmul, one fully lane-dense store.
    out = jnp.dot(y.astype(wh_ref.dtype), wh_ref[...],
                  preferred_element_type=jnp.float32) + bh_ref[...]
    out_ref[...] = out.astype(out_ref.dtype)


def _choose_tile_rows(h, w, target):
    """Largest divisor of h that is <= target and keeps TH*W a multiple of 8."""
    target = max(1, min(h, target))
    for th in range(target, 0, -1):
        if h % th == 0 and (th * w) % 8 == 0:
            return th
    return h


def rpn_head_forward(x_nchw, params, *, tile_rows=8,
                     compute_dtype=jnp.bfloat16):
    """x_nchw: (N, Cin, H, W) f32 -> (obj (N, A, H, W), bbx (N, 4A, H, W)) f32.

    tile_rows: row-strip height target (use 32-64 for production feature maps).
    compute_dtype: operand dtype for the MXU matmuls (f32 accumulation always).
    """
    N, Cin, H, W = x_nchw.shape
    w1 = params["w1"]                                    # (3, 3, Cin, Chid) [dy, dx]
    Chid = w1.shape[3]
    bn_scale = params["bn_scale"].reshape(1, Chid)
    bn_bias = params["bn_bias"].reshape(1, Chid).astype(jnp.float32)
    w_obj, b_obj = params["w_obj"], params["b_obj"]      # (Chid, A), (1, A)
    w_bbx, b_bbx = params["w_bbx"], params["b_bbx"]      # (Chid, 4A), (1, 4A)
    A = w_obj.shape[1]
    A5 = A + w_bbx.shape[1]

    # Fold BN scale into the conv weight (exact: scale is per conv1 out-channel),
    # reorder taps to [dx][dy] so the kernel's loop indexing is a flat int.
    w1f = (w1 * bn_scale[0])                              # (dy, dx, Cin, Chid)
    w1f = jnp.transpose(w1f, (1, 0, 2, 3)).reshape(9, Cin, Chid)
    w1f = w1f.astype(compute_dtype)

    # Fuse obj|bbx heads and pad the channel axis to a full 128-lane multiple
    # so the kernel output is lane-dense (unmasked stores).
    Cpad = max(128, -(-A5 // 128) * 128)
    w_head = jnp.concatenate([w_obj, w_bbx], axis=1)
    b_head = jnp.concatenate([b_obj, b_bbx], axis=1)
    w_head = jnp.pad(w_head, ((0, 0), (0, Cpad - A5))).astype(compute_dtype)
    b_head = jnp.pad(b_head, ((0, 0), (0, Cpad - A5))).astype(jnp.float32)

    # NCHW -> NHWC (channels on lanes), zero pad, build the three dx column
    # shifts, then extract overlapping (TH+2)-row strips and flatten them to
    # ((TH+2)*W, Cin) slabs so every BlockSpec stays plain Blocked and the
    # kernel needs no reshapes.
    TH = _choose_tile_rows(H, W, tile_rows)
    S = H // TH
    x_nhwc = jnp.transpose(x_nchw, (0, 2, 3, 1)).astype(compute_dtype)
    x_pad = jnp.pad(x_nhwc, ((0, 0), (1, 1), (1, 1), (0, 0)))  # (N, H+2, W+2, Cin)
    x_dx = jnp.stack([x_pad[:, :, dx:dx + W, :] for dx in range(3)],
                     axis=1)                              # (N, 3, H+2, W, Cin)
    x_strips = jnp.stack(
        [x_dx[:, :, s * TH:s * TH + TH + 2, :, :] for s in range(S)],
        axis=1)                                           # (N, S, 3, TH+2, W, Cin)
    x_slabs = x_strips.reshape(N, S, 3, (TH + 2) * W, Cin)

    out = pl.pallas_call(
        rpn_head_kernel,
        out_shape=jax.ShapeDtypeStruct((N, S * TH * W, Cpad), jnp.float32),
        grid_spec=pl.GridSpec(
            grid=(N, S),
            in_specs=[
                pl.BlockSpec((None, None, 3, (TH + 2) * W, Cin),
                             lambda n, s: (n, s, 0, 0, 0)),
                # Weight / bias specs are grid-invariant (fetched once).
                pl.BlockSpec((9, Cin, Chid), lambda n, s: (0, 0, 0)),
                pl.BlockSpec((1, Chid), lambda n, s: (0, 0)),
                pl.BlockSpec((Chid, Cpad), lambda n, s: (0, 0)),
                pl.BlockSpec((1, Cpad), lambda n, s: (0, 0)),
            ],
            out_specs=pl.BlockSpec((None, TH * W, Cpad),
                                   lambda n, s: (n, s, 0)),
        ),
        compiler_params=pltpu.CompilerParams(
            dimension_semantics=("parallel", "parallel"),
            vmem_limit_bytes=48 * 1024 * 1024),
    )(x_slabs, w1f, bn_bias, w_head, b_head)

    # (N, H*W, Cpad) -> slice off the lane padding, split obj/bbx, back to NCHW.
    out = out[:, :, :A5].reshape(N, H, W, A5)
    obj = jnp.transpose(out[..., :A], (0, 3, 1, 2))
    bbx = jnp.transpose(out[..., A:], (0, 3, 1, 2))
    return obj, bbx


def rpn_head_reference(x_nchw, params, compute_dtype=jnp.bfloat16):
    """Pure-JAX reference with the same operand quantization as the kernel."""
    cd = compute_dtype
    w1 = (params["w1"] * params["bn_scale"].reshape(1, 1, 1, -1))
    w1 = w1.astype(cd).astype(jnp.float32)
    w_obj = params["w_obj"].astype(cd).astype(jnp.float32)
    w_bbx = params["w_bbx"].astype(cd).astype(jnp.float32)
    x = jnp.transpose(x_nchw, (0, 2, 3, 1)).astype(cd).astype(jnp.float32)
    xp = jnp.pad(x, ((0, 0), (1, 1), (1, 1), (0, 0)))
    n, hp, wp, _ = xp.shape
    h, w = hp - 2, wp - 2
    acc = jnp.zeros((n, h, w, w1.shape[3]), jnp.float32)
    for dy in range(3):
        for dx in range(3):
            acc = acc + jnp.einsum("nhwc,co->nhwo",
                                   xp[:, dy:dy + h, dx:dx + w, :], w1[dy, dx])
    y = acc + params["bn_bias"].reshape(1, 1, 1, -1)
    y = jnp.where(y > 0, y, 0.01 * y)
    yq = y.astype(cd).astype(jnp.float32)
    obj = jnp.einsum("nhwc,ca->nhwa", yq, w_obj) + params["b_obj"][0]
    bbx = jnp.einsum("nhwc,ca->nhwa", yq, w_bbx) + params["b_bbx"][0]
    return jnp.transpose(obj, (0, 3, 1, 2)), jnp.transpose(bbx, (0, 3, 1, 2))


def _xavier_normal(key, out_ch, in_ch, kh, kw, gain):
    fan_in = in_ch * kh * kw
    fan_out = out_ch * kh * kw
    std = gain * math.sqrt(2.0 / (fan_in + fan_out))
    return std * jax.random.normal(key, (out_ch, in_ch, kh, kw), jnp.float32)


def make_params(key, in_channels, num_anchors, hidden_channels):
    k1, k2, k3 = jax.random.split(key, 3)

    # conv1: xavier_normal_ with gain for leaky_relu(0.01).
    gain1 = math.sqrt(2.0 / (1.0 + 0.01 ** 2))
    w1_oihw = _xavier_normal(k1, hidden_channels, in_channels, 3, 3, gain1)
    w1 = jnp.transpose(w1_oihw, (2, 3, 1, 0))            # (kh, kw, in, out)

    # BatchNorm reset_parameters(): gamma=1, beta=0, mean=0, var=1.
    eps = 1e-5
    gamma = jnp.ones((hidden_channels,), jnp.float32)
    beta = jnp.zeros((hidden_channels,), jnp.float32)
    running_mean = jnp.zeros((hidden_channels,), jnp.float32)
    running_var = jnp.ones((hidden_channels,), jnp.float32)
    bn_scale = gamma / jnp.sqrt(running_var + eps)
    bn_bias = beta - running_mean * bn_scale

    # conv_obj / conv_bbx: xavier_normal_(gain=0.01), bias = 0.
    w_obj_oihw = _xavier_normal(k2, num_anchors, hidden_channels, 1, 1, 0.01)
    w_bbx_oihw = _xavier_normal(k3, num_anchors * 4, hidden_channels, 1, 1, 0.01)
    w_obj = jnp.transpose(w_obj_oihw[:, :, 0, 0], (1, 0))   # (Chid, A)
    w_bbx = jnp.transpose(w_bbx_oihw[:, :, 0, 0], (1, 0))   # (Chid, 4A)
    b_obj = jnp.zeros((1, num_anchors), jnp.float32)
    b_bbx = jnp.zeros((1, num_anchors * 4), jnp.float32)

    return {
        "w1": w1,
        "bn_scale": bn_scale.reshape(1, hidden_channels),
        "bn_bias": bn_bias.reshape(1, hidden_channels),
        "w_obj": w_obj,
        "b_obj": b_obj,
        "w_bbx": w_bbx,
        "b_bbx": b_bbx,
    }


if __name__ == "__main__":
    # Small, forward-consistent shapes (2 row strips per image -> halo path exercised).
    N, Cin, H, W = 2, 8, 16, 16
    hidden = 32
    num_anchors = 4

    key = jax.random.PRNGKey(0)
    kx, kp = jax.random.split(key)
    x = jax.random.normal(kx, (N, Cin, H, W), jnp.float32)
    params = make_params(kp, Cin, num_anchors, hidden)

    obj_logits, bbx_logits = jax.jit(rpn_head_forward)(x, params)
    jax.block_until_ready((obj_logits, bbx_logits))

    assert obj_logits.shape == (N, num_anchors, H, W)
    assert bbx_logits.shape == (N, num_anchors * 4, H, W)

    # Correctness check against a pure-JAX reference (same bf16 operand cast,
    # f32 accumulation); differences are only summation order / double rounding.
    obj_ref, bbx_ref = rpn_head_reference(x, params)
    err_obj = float(jnp.max(jnp.abs(obj_logits - obj_ref)))
    err_bbx = float(jnp.max(jnp.abs(bbx_logits - bbx_ref)))
    assert err_obj < 5e-3, f"obj mismatch: {err_obj}"
    assert err_bbx < 5e-3, f"bbx mismatch: {err_bbx}"

    print("KERNEL_OK")
</pallas_src>

<mosaic_0001>
module attributes {stable_mosaic.version = 11 : i64} {
  func.func @rpn_head_kernel(%arg0: i32, %arg1: i32, %arg2: memref<1x1x3x160x8xbf16, #tpu.memory_space<vmem>>, %arg3: memref<9x8x32xbf16, #tpu.memory_space<vmem>>, %arg4: memref<1x32xf32, #tpu.memory_space<vmem>>, %arg5: memref<32x128xbf16, #tpu.memory_space<vmem>>, %arg6: memref<1x128xf32, #tpu.memory_space<vmem>>, %arg7: memref<1x128x128xf32, #tpu.memory_space<vmem>>) attributes {dimension_semantics = [#tpu.dimension_semantics<parallel>, #tpu.dimension_semantics<parallel>], iteration_bounds = array<i64: 2, 2>, scalar_prefetch = 0 : i64, scratch_operands = 0 : i64, tpu.core_type = #tpu.core_type<tc>, window_params = [{transform_indices = @transform_0, window_bounds = array<i64: 1, 1, 3, 160, 8>}, {pipeline_mode = #tpu.pipeline_mode<synchronous>, transform_indices = @transform_1, window_bounds = array<i64: 9, 8, 32>}, {pipeline_mode = #tpu.pipeline_mode<synchronous>, transform_indices = @transform_2, window_bounds = array<i64: 1, 32>}, {pipeline_mode = #tpu.pipeline_mode<synchronous>, transform_indices = @transform_3, window_bounds = array<i64: 32, 128>}, {pipeline_mode = #tpu.pipeline_mode<synchronous>, transform_indices = @transform_4, window_bounds = array<i64: 1, 128>}, {transform_indices = @transform_5, window_bounds = array<i64: 1, 128, 128>}]} {
    %cst = arith.constant 0.000000e+00 : f32
    %0 = vector.broadcast %cst : f32 to vector<128x32xf32>
    %c0 = arith.constant 0 : index
    %c0_0 = arith.constant 0 : index
    %c0_1 = arith.constant 0 : index
    %c0_2 = arith.constant 0 : index
    %c0_3 = arith.constant 0 : index
    %1 = vector.load %arg2[%c0, %c0_0, %c0_1, %c0_2, %c0_3] : memref<1x1x3x160x8xbf16, #tpu.memory_space<vmem>>, vector<1x1x1x128x8xbf16>
    %2 = vector.shape_cast %1 : vector<1x1x1x128x8xbf16> to vector<128x8xbf16>
    %c0_4 = arith.constant 0 : index
    %c0_5 = arith.constant 0 : index
    %c0_6 = arith.constant 0 : index
    %3 = vector.load %arg3[%c0_4, %c0_5, %c0_6] : memref<9x8x32xbf16, #tpu.memory_space<vmem>>, vector<1x8x32xbf16>
    %4 = vector.shape_cast %3 : vector<1x8x32xbf16> to vector<8x32xbf16>
    %cst_7 = arith.constant dense<0.000000e+00> : vector<128x32xf32>
    %5 = tpu.matmul %2, %4, %cst_7 {dimension_numbers = #tpu.dot_dimension_numbers<[1], [0], [0], [1], [0, 0, 1, 1], [], []>} : vector<128x8xbf16>, vector<8x32xbf16>, vector<128x32xf32> -> vector<128x32xf32>
    %6 = arith.addf %0, %5 : vector<128x32xf32>
    %c0_8 = arith.constant 0 : index
    %c0_9 = arith.constant 0 : index
    %c0_10 = arith.constant 0 : index
    %c16 = arith.constant 16 : index
    %c0_11 = arith.constant 0 : index
    %7 = vector.load %arg2[%c0_8, %c0_9, %c0_10, %c16, %c0_11] : memref<1x1x3x160x8xbf16, #tpu.memory_space<vmem>>, vector<1x1x1x128x8xbf16>
    %8 = vector.shape_cast %7 : vector<1x1x1x128x8xbf16> to vector<128x8xbf16>
    %c1 = arith.constant 1 : index
    %c0_12 = arith.constant 0 : index
    %c0_13 = arith.constant 0 : index
    %9 = vector.load %arg3[%c1, %c0_12, %c0_13] : memref<9x8x32xbf16, #tpu.memory_space<vmem>>, vector<1x8x32xbf16>
    %10 = vector.shape_cast %9 : vector<1x8x32xbf16> to vector<8x32xbf16>
    %cst_14 = arith.constant dense<0.000000e+00> : vector<128x32xf32>
    %11 = tpu.matmul %8, %10, %cst_14 {dimension_numbers = #tpu.dot_dimension_numbers<[1], [0], [0], [1], [0, 0, 1, 1], [], []>} : vector<128x8xbf16>, vector<8x32xbf16>, vector<128x32xf32> -> vector<128x32xf32>
    %12 = arith.addf %6, %11 : vector<128x32xf32>
    %c0_15 = arith.constant 0 : index
    %c0_16 = arith.constant 0 : index
    %c0_17 = arith.constant 0 : index
    %c32 = arith.constant 32 : index
    %c0_18 = arith.constant 0 : index
    %13 = vector.load %arg2[%c0_15, %c0_16, %c0_17, %c32, %c0_18] : memref<1x1x3x160x8xbf16, #tpu.memory_space<vmem>>, vector<1x1x1x128x8xbf16>
    %14 = vector.shape_cast %13 : vector<1x1x1x128x8xbf16> to vector<128x8xbf16>
    %c2 = arith.constant 2 : index
    %c0_19 = arith.constant 0 : index
    %c0_20 = arith.constant 0 : index
    %15 = vector.load %arg3[%c2, %c0_19, %c0_20] : memref<9x8x32xbf16, #tpu.memory_space<vmem>>, vector<1x8x32xbf16>
    %16 = vector.shape_cast %15 : vector<1x8x32xbf16> to vector<8x32xbf16>
    %cst_21 = arith.constant dense<0.000000e+00> : vector<128x32xf32>
    %17 = tpu.matmul %14, %16, %cst_21 {dimension_numbers = #tpu.dot_dimension_numbers<[1], [0], [0], [1], [0, 0, 1, 1], [], []>} : vector<128x8xbf16>, vector<8x32xbf16>, vector<128x32xf32> -> vector<128x32xf32>
    %18 = arith.addf %12, %17 : vector<128x32xf32>
    %c0_22 = arith.constant 0 : index
    %c0_23 = arith.constant 0 : index
    %c1_24 = arith.constant 1 : index
    %c0_25 = arith.constant 0 : index
    %c0_26 = arith.constant 0 : index
    %19 = vector.load %arg2[%c0_22, %c0_23, %c1_24, %c0_25, %c0_26] : memref<1x1x3x160x8xbf16, #tpu.memory_space<vmem>>, vector<1x1x1x128x8xbf16>
    %20 = vector.shape_cast %19 : vector<1x1x1x128x8xbf16> to vector<128x8xbf16>
    %c3 = arith.constant 3 : index
    %c0_27 = arith.constant 0 : index
    %c0_28 = arith.constant 0 : index
    %21 = vector.load %arg3[%c3, %c0_27, %c0_28] : memref<9x8x32xbf16, #tpu.memory_space<vmem>>, vector<1x8x32xbf16>
    %22 = vector.shape_cast %21 : vector<1x8x32xbf16> to vector<8x32xbf16>
    %cst_29 = arith.constant dense<0.000000e+00> : vector<128x32xf32>
    %23 = tpu.matmul %20, %22, %cst_29 {dimension_numbers = #tpu.dot_dimension_numbers<[1], [0], [0], [1], [0, 0, 1, 1], [], []>} : vector<128x8xbf16>, vector<8x32xbf16>, vector<128x32xf32> -> vector<128x32xf32>
    %24 = arith.addf %18, %23 : vector<128x32xf32>
    %c0_30 = arith.constant 0 : index
    %c0_31 = arith.constant 0 : index
    %c1_32 = arith.constant 1 : index
    %c16_33 = arith.constant 16 : index
    %c0_34 = arith.constant 0 : index
    %25 = vector.load %arg2[%c0_30, %c0_31, %c1_32, %c16_33, %c0_34] : memref<1x1x3x160x8xbf16, #tpu.memory_space<vmem>>, vector<1x1x1x128x8xbf16>
    %26 = vector.shape_cast %25 : vector<1x1x1x128x8xbf16> to vector<128x8xbf16>
    %c4 = arith.constant 4 : index
    %c0_35 = arith.constant 0 : index
    %c0_36 = arith.constant 0 : index
    %27 = vector.load %arg3[%c4, %c0_35, %c0_36] : memref<9x8x32xbf16, #tpu.memory_space<vmem>>, vector<1x8x32xbf16>
    %28 = vector.shape_cast %27 : vector<1x8x32xbf16> to vector<8x32xbf16>
    %cst_37 = arith.constant dense<0.000000e+00> : vector<128x32xf32>
    %29 = tpu.matmul %26, %28, %cst_37 {dimension_numbers = #tpu.dot_dimension_numbers<[1], [0], [0], [1], [0, 0, 1, 1], [], []>} : vector<128x8xbf16>, vector<8x32xbf16>, vector<128x32xf32> -> vector<128x32xf32>
    %30 = arith.addf %24, %29 : vector<128x32xf32>
    %c0_38 = arith.constant 0 : index
    %c0_39 = arith.constant 0 : index
    %c1_40 = arith.constant 1 : index
    %c32_41 = arith.constant 32 : index
    %c0_42 = arith.constant 0 : index
    %31 = vector.load %arg2[%c0_38, %c0_39, %c1_40, %c32_41, %c0_42] : memref<1x1x3x160x8xbf16, #tpu.memory_space<vmem>>, vector<1x1x1x128x8xbf16>
    %32 = vector.shape_cast %31 : vector<1x1x1x128x8xbf16> to vector<128x8xbf16>
    %c5 = arith.constant 5 : index
    %c0_43 = arith.constant 0 : index
    %c0_44 = arith.constant 0 : index
    %33 = vector.load %arg3[%c5, %c0_43, %c0_44] : memref<9x8x32xbf16, #tpu.memory_space<vmem>>, vector<1x8x32xbf16>
    %34 = vector.shape_cast %33 : vector<1x8x32xbf16> to vector<8x32xbf16>
    %cst_45 = arith.constant dense<0.000000e+00> : vector<128x32xf32>
    %35 = tpu.matmul %32, %34, %cst_45 {dimension_numbers = #tpu.dot_dimension_numbers<[1], [0], [0], [1], [0, 0, 1, 1], [], []>} : vector<128x8xbf16>, vector<8x32xbf16>, vector<128x32xf32> -> vector<128x32xf32>
    %36 = arith.addf %30, %35 : vector<128x32xf32>
    %c0_46 = arith.constant 0 : index
    %c0_47 = arith.constant 0 : index
    %c2_48 = arith.constant 2 : index
    %c0_49 = arith.constant 0 : index
    %c0_50 = arith.constant 0 : index
    %37 = vector.load %arg2[%c0_46, %c0_47, %c2_48, %c0_49, %c0_50] : memref<1x1x3x160x8xbf16, #tpu.memory_space<vmem>>, vector<1x1x1x128x8xbf16>
    %38 = vector.shape_cast %37 : vector<1x1x1x128x8xbf16> to vector<128x8xbf16>
    %c6 = arith.constant 6 : index
    %c0_51 = arith.constant 0 : index
    %c0_52 = arith.constant 0 : index
    %39 = vector.load %arg3[%c6, %c0_51, %c0_52] : memref<9x8x32xbf16, #tpu.memory_space<vmem>>, vector<1x8x32xbf16>
    %40 = vector.shape_cast %39 : vector<1x8x32xbf16> to vector<8x32xbf16>
    %cst_53 = arith.constant dense<0.000000e+00> : vector<128x32xf32>
    %41 = tpu.matmul %38, %40, %cst_53 {dimension_numbers = #tpu.dot_dimension_numbers<[1], [0], [0], [1], [0, 0, 1, 1], [], []>} : vector<128x8xbf16>, vector<8x32xbf16>, vector<128x32xf32> -> vector<128x32xf32>
    %42 = arith.addf %36, %41 : vector<128x32xf32>
    %c0_54 = arith.constant 0 : index
    %c0_55 = arith.constant 0 : index
    %c2_56 = arith.constant 2 : index
    %c16_57 = arith.constant 16 : index
    %c0_58 = arith.constant 0 : index
    %43 = vector.load %arg2[%c0_54, %c0_55, %c2_56, %c16_57, %c0_58] : memref<1x1x3x160x8xbf16, #tpu.memory_space<vmem>>, vector<1x1x1x128x8xbf16>
    %44 = vector.shape_cast %43 : vector<1x1x1x128x8xbf16> to vector<128x8xbf16>
    %c7 = arith.constant 7 : index
    %c0_59 = arith.constant 0 : index
    %c0_60 = arith.constant 0 : index
    %45 = vector.load %arg3[%c7, %c0_59, %c0_60] : memref<9x8x32xbf16, #tpu.memory_space<vmem>>, vector<1x8x32xbf16>
    %46 = vector.shape_cast %45 : vector<1x8x32xbf16> to vector<8x32xbf16>
    %cst_61 = arith.constant dense<0.000000e+00> : vector<128x32xf32>
    %47 = tpu.matmul %44, %46, %cst_61 {dimension_numbers = #tpu.dot_dimension_numbers<[1], [0], [0], [1], [0, 0, 1, 1], [], []>} : vector<128x8xbf16>, vector<8x32xbf16>, vector<128x32xf32> -> vector<128x32xf32>
    %48 = arith.addf %42, %47 : vector<128x32xf32>
    %c0_62 = arith.constant 0 : index
    %c0_63 = arith.constant 0 : index
    %c2_64 = arith.constant 2 : index
    %c32_65 = arith.constant 32 : index
    %c0_66 = arith.constant 0 : index
    %49 = vector.load %arg2[%c0_62, %c0_63, %c2_64, %c32_65, %c0_66] : memref<1x1x3x160x8xbf16, #tpu.memory_space<vmem>>, vector<1x1x1x128x8xbf16>
    %50 = vector.shape_cast %49 : vector<1x1x1x128x8xbf16> to vector<128x8xbf16>
    %c8 = arith.constant 8 : index
    %c0_67 = arith.constant 0 : index
    %c0_68 = arith.constant 0 : index
    %51 = vector.load %arg3[%c8, %c0_67, %c0_68] : memref<9x8x32xbf16, #tpu.memory_space<vmem>>, vector<1x8x32xbf16>
    %52 = vector.shape_cast %51 : vector<1x8x32xbf16> to vector<8x32xbf16>
    %cst_69 = arith.constant dense<0.000000e+00> : vector<128x32xf32>
    %53 = tpu.matmul %50, %52, %cst_69 {dimension_numbers = #tpu.dot_dimension_numbers<[1], [0], [0], [1], [0, 0, 1, 1], [], []>} : vector<128x8xbf16>, vector<8x32xbf16>, vector<128x32xf32> -> vector<128x32xf32>
    %54 = arith.addf %48, %53 : vector<128x32xf32>
    %c0_70 = arith.constant 0 : index
    %c0_71 = arith.constant 0 : index
    %55 = vector.load %arg4[%c0_70, %c0_71] : memref<1x32xf32, #tpu.memory_space<vmem>>, vector<1x32xf32>
    %56 = vector.broadcast %55 : vector<1x32xf32> to vector<128x32xf32>
    %57 = arith.addf %54, %56 : vector<128x32xf32>
    %cst_72 = arith.constant 0.000000e+00 : f32
    %58 = vector.broadcast %cst_72 : f32 to vector<128x32xf32>
    %59 = arith.cmpf ogt, %57, %58 : vector<128x32xf32>
    %cst_73 = arith.constant 0.00999999977 : f32
    %60 = vector.broadcast %cst_73 : f32 to vector<128x32xf32>
    %61 = arith.mulf %60, %57 : vector<128x32xf32>
    %62 = arith.select %59, %57, %61 : vector<128x32xi1>, vector<128x32xf32>
    %63 = arith.truncf %62 : vector<128x32xf32> to vector<128x32xbf16>
    %c0_74 = arith.constant 0 : index
    %c0_75 = arith.constant 0 : index
    %64 = vector.load %arg5[%c0_74, %c0_75] : memref<32x128xbf16, #tpu.memory_space<vmem>>, vector<32x128xbf16>
    %cst_76 = arith.constant dense<0.000000e+00> : vector<128x128xf32>
    %65 = tpu.matmul %63, %64, %cst_76 {dimension_numbers = #tpu.dot_dimension_numbers<[1], [0], [0], [1], [0, 0, 1, 1], [], []>} : vector<128x32xbf16>, vector<32x128xbf16>, vector<128x128xf32> -> vector<128x128xf32>
    %c0_77 = arith.constant 0 : index
    %c0_78 = arith.constant 0 : index
    %66 = vector.load %arg6[%c0_77, %c0_78] : memref<1x128xf32, #tpu.memory_space<vmem>>, vector<1x128xf32>
    %67 = vector.broadcast %66 : vector<1x128xf32> to vector<128x128xf32>
    %68 = arith.addf %65, %67 : vector<128x128xf32>
    %c0_79 = arith.constant 0 : index
    %c0_80 = arith.constant 0 : index
    %c0_81 = arith.constant 0 : index
    %69 = vector.load %arg7[%c0_79, %c0_80, %c0_81] : memref<1x128x128xf32, #tpu.memory_space<vmem>>, vector<1x128x128xf32>
    %70 = vector.shape_cast %69 : vector<1x128x128xf32> to vector<128x128xf32>
    %71 = vector.shape_cast %68 : vector<128x128xf32> to vector<1x128x128xf32>
    tpu.vector_store %arg7[%c0_79, %c0_80, %c0_81], %71 {strides = array<i32>} : memref<1x128x128xf32, #tpu.memory_space<vmem>>, vector<1x128x128xf32>,
    return
  }
  func.func @transform_0(%arg0: i32, %arg1: i32) -> (i32, i32, i32, i32, i32) {
    %c0_i32 = arith.constant 0 : i32
    %c0_i32_0 = arith.constant 0 : i32
    %c0_i32_1 = arith.constant 0 : i32
    %c0_i32_2 = arith.constant 0 : i32
    return %arg0, %arg1, %c0_i32, %c0_i32_0, %c0_i32_1 : i32, i32, i32, i32, i32
  }
  func.func @transform_1(%arg0: i32, %arg1: i32) -> (i32, i32, i32) {
    %c0_i32 = arith.constant 0 : i32
    %c0_i32_0 = arith.constant 0 : i32
    %c0_i32_1 = arith.constant 0 : i32
    %c0_i32_2 = arith.constant 0 : i32
    return %c0_i32, %c0_i32_0, %c0_i32_1 : i32, i32, i32
  }
  func.func @transform_2(%arg0: i32, %arg1: i32) -> (i32, i32) {
    %c0_i32 = arith.constant 0 : i32
    %c0_i32_0 = arith.constant 0 : i32
    %c0_i32_1 = arith.constant 0 : i32
    return %c0_i32, %c0_i32_0 : i32, i32
  }
  func.func @transform_3(%arg0: i32, %arg1: i32) -> (i32, i32) {
    %c0_i32 = arith.constant 0 : i32
    %c0_i32_0 = arith.constant 0 : i32
    %c0_i32_1 = arith.constant 0 : i32
    return %c0_i32, %c0_i32_0 : i32, i32
  }
  func.func @transform_4(%arg0: i32, %arg1: i32) -> (i32, i32) {
    %c0_i32 = arith.constant 0 : i32
    %c0_i32_0 = arith.constant 0 : i32
    %c0_i32_1 = arith.constant 0 : i32
    return %c0_i32, %c0_i32_0 : i32, i32
  }
  func.func @transform_5(%arg0: i32, %arg1: i32) -> (i32, i32, i32) {
    %c0_i32 = arith.constant 0 : i32
    %c0_i32_0 = arith.constant 0 : i32
    return %arg0, %arg1, %c0_i32 : i32, i32, i32
  }
}

</mosaic_0001>

<llo_original>
// kernel: rpn_head_forward.1
$region0: #{rpn_head_forward.1}
  #allocation0 [shape = 'u32[]', space=smem, size = 0x4, offset = 0x4, fixed_abs, tag = 'smem constant byte address 0x4 - core index']
  #allocation1 [shape = 'u32[144,128]{1,0:T(1,128)}', space=vmem, size = 0x12000, scoped, tag = 'internal scratch']
  %s0 = inlined_call_operand.vmem [shape: bf16[2,2,3,160,8], index: 0, kind: input, shape index: {}]
  %s1 = inlined_call_operand.vmem [shape: bf16[9,8,32], index: 1, kind: input, shape index: {}]
  %s2 = inlined_call_operand.vmem [shape: f32[1,32], index: 2, kind: input, shape index: {}]
  %s3 = inlined_call_operand.vmem [shape: bf16[32,128], index: 3, kind: input, shape index: {}]
  %s4 = inlined_call_operand.vmem [shape: f32[1,128], index: 4, kind: input, shape index: {}]
  %s5 = inlined_call_operand.vmem [shape: f32[2,256,128], index: 5, kind: output, shape index: {}]
  %s6 = sld [smem:[#allocation0]]
  $region53: #{rpn_head_forward.1} parent=0
    _
  %s8 = ssub.s32 1, %s6
  %s9 = scalar_select 0, %s8, %s6
  loop: start=0, step=1, limit=6
  $region2: #{rpn_head_forward.1} parent=0 // loop_pre_header
    _
  $region3: #{rpn_head_forward.1} parent=0 // loop_header
    %s11 = sphi 0, %s15
    %p12 = scmp.ge.s32.totalorder %s11, 6
    %s18 = sphi 0, %s30
    %s19 = sphi 0, %s26
    %s20 = sphi 0, %s18
    %s21 = sphi 0, %s19
    %s22 = sphi 0, %s20
    %s23 = sphi 0, %s21
    %s35 = sphi 0, %s37
    %s38 = sphi 0, %s35
    %s39 = sphi 0, %s38
    %s55 = sphi 0, %s39
    %s59 = sphi 0, %s59
    %s61 = sphi 0, %s59
    %s62 = sphi 0, %s61
    %s76 = sphi 0, %s62
    %s80 = sphi 0, %s80
    %s82 = sphi 0, %s80
    %s83 = sphi 0, %s82
    %s97 = sphi 0, %s83
    %s101 = sphi 0, %s101
    %s103 = sphi 0, %s101
    %s104 = sphi 0, %s103
    %s118 = sphi 0, %s104
    %s122 = sphi 0, %s122
    %s124 = sphi 0, %s122
    %s125 = sphi 0, %s124
    %s139 = sphi 0, %s125
    %s147 = sphi 0, %s149
    %s150 = sphi 0, %s147
    %s151 = sphi 0, %s150
    %s167 = sphi 0, %s151
  $region4: #{rpn_head_forward.1} parent=0 // loop_header_branch
    %14 = sbr.rel (%p12) target = $region8
  $region5: #{rpn_head_forward.1} parent=0 // loop_body
    %s16 = ssub.s32 %s11, 1
    %s17 = ssub.s32 %s11, 2
    %s24 = sadd.s32 1, %s19
    %p25 = scmp.ge.s32.totalorder %s24, 2
    %s26 = scalar_select %p25, 0, %s24
    %s27 = sadd.s32 1, %s18
    %s28 = scalar_select %p25, %s27, %s18
    %p29 = scmp.ge.s32.totalorder %s28, 2
    %s30 = scalar_select %p29, 0, %s28
    %s31 = ssub.s32 %s18, %s30
    %s32 = ssub.s32 %s19, %s26
    %s33 = sor.u32 %s31, %s32
    %p34 = scmp.eq.s32.totalorder %s33, 0
    %s36 = sadd.s32 %s35, 1
    %s37 = scalar_select %p34, %s35, %s36
    %p40 = pneg %p34
    %p41 = scmp.eq.s32.totalorder %s11, 3
    %p42 = por %p40, %p41
    %p43 = scmp.ne.s32.totalorder %s35, %s38
    %p44 = scmp.eq.s32.totalorder %s11, 0
    %p45 = por %p43, %p44
    %p46 = scmp.ne.s32.totalorder %s35, %s38
    %p47 = scmp.eq.s32.totalorder %s16, 3
    %p48 = por %p46, %p47
    %p49 = scmp.ne.s32.totalorder %s38, %s39
    %p50 = scmp.eq.s32.totalorder %s16, 0
    %p51 = por %p49, %p50
    %p52 = scmp.ne.s32.totalorder %s38, %s39
    %p53 = scmp.eq.s32.totalorder %s17, 3
    %p54 = por %p52, %p53
    %p56 = scmp.ne.s32.totalorder %s39, %s55
    %p57 = scmp.eq.s32.totalorder %s17, 0
    %p58 = por %p56, %p57
    %s60 = sadd.s32 %s59, 1
    %p63 = scmp.eq.s32.totalorder %s11, 3
    %p64 = scmp.ne.s32.totalorder %s59, %s61
    %p65 = scmp.eq.s32.totalorder %s11, 0
    %p66 = por %p64, %p65
    %p67 = scmp.ne.s32.totalorder %s59, %s61
    %p68 = scmp.eq.s32.totalorder %s16, 3
    %p69 = por %p67, %p68
    %p70 = scmp.ne.s32.totalorder %s61, %s62
    %p71 = scmp.eq.s32.totalorder %s16, 0
    %p72 = por %p70, %p71
    %p73 = scmp.ne.s32.totalorder %s61, %s62
    %p74 = scmp.eq.s32.totalorder %s17, 3
    %p75 = por %p73, %p74
    %p77 = scmp.ne.s32.totalorder %s62, %s76
    %p78 = scmp.eq.s32.totalorder %s17, 0
    %p79 = por %p77, %p78
    %s81 = sadd.s32 %s80, 1
    %p84 = scmp.eq.s32.totalorder %s11, 3
    %p85 = scmp.ne.s32.totalorder %s80, %s82
    %p86 = scmp.eq.s32.totalorder %s11, 0
    %p87 = por %p85, %p86
    %p88 = scmp.ne.s32.totalorder %s80, %s82
    %p89 = scmp.eq.s32.totalorder %s16, 3
    %p90 = por %p88, %p89
    %p91 = scmp.ne.s32.totalorder %s82, %s83
    %p92 = scmp.eq.s32.totalorder %s16, 0
    %p93 = por %p91, %p92
    %p94 = scmp.ne.s32.totalorder %s82, %s83
    %p95 = scmp.eq.s32.totalorder %s17, 3
    %p96 = por %p94, %p95
    %p98 = scmp.ne.s32.totalorder %s83, %s97
    %p99 = scmp.eq.s32.totalorder %s17, 0
    %p100 = por %p98, %p99
    %s102 = sadd.s32 %s101, 1
    %p105 = scmp.eq.s32.totalorder %s11, 3
    %p106 = scmp.ne.s32.totalorder %s101, %s103
    %p107 = scmp.eq.s32.totalorder %s11, 0
    %p108 = por %p106, %p107
    %p109 = scmp.ne.s32.totalorder %s101, %s103
    %p110 = scmp.eq.s32.totalorder %s16, 3
    %p111 = por %p109, %p110
    %p112 = scmp.ne.s32.totalorder %s103, %s104
    %p113 = scmp.eq.s32.totalorder %s16, 0
    %p114 = por %p112, %p113
    %p115 = scmp.ne.s32.totalorder %s103, %s104
    %p116 = scmp.eq.s32.totalorder %s17, 3
    %p117 = por %p115, %p116
    %p119 = scmp.ne.s32.totalorder %s104, %s118
    %p120 = scmp.eq.s32.totalorder %s17, 0
    %p121 = por %p119, %p120
    %s123 = sadd.s32 %s122, 1
    %p126 = scmp.eq.s32.totalorder %s11, 3
    %p127 = scmp.ne.s32.totalorder %s122, %s124
    %p128 = scmp.eq.s32.totalorder %s11, 0
    %p129 = por %p127, %p128
    %p130 = scmp.ne.s32.totalorder %s122, %s124
    %p131 = scmp.eq.s32.totalorder %s16, 3
    %p132 = por %p130, %p131
    %p133 = scmp.ne.s32.totalorder %s124, %s125
    %p134 = scmp.eq.s32.totalorder %s16, 0
    %p135 = por %p133, %p134
    %p136 = scmp.ne.s32.totalorder %s124, %s125
    %p137 = scmp.eq.s32.totalorder %s17, 3
    %p138 = por %p136, %p137
    %p140 = scmp.ne.s32.totalorder %s125, %s139
    %p141 = scmp.eq.s32.totalorder %s17, 0
    %p142 = por %p140, %p141
    %s143 = ssub.s32 %s18, %s30
    %s144 = ssub.s32 %s19, %s26
    %s145 = sor.u32 %s143, %s144
    %p146 = scmp.eq.s32.totalorder %s145, 0
    %s148 = sadd.s32 %s147, 1
    %s149 = scalar_select %p146, %s147, %s148
    %p152 = pneg %p146
    %p153 = scmp.eq.s32.totalorder %s11, 3
    %p154 = por %p152, %p153
    %p155 = scmp.ne.s32.totalorder %s147, %s150
    %p156 = scmp.eq.s32.totalorder %s11, 0
    %p157 = por %p155, %p156
    %p158 = scmp.ne.s32.totalorder %s147, %s150
    %p159 = scmp.eq.s32.totalorder %s16, 3
    %p160 = por %p158, %p159
    %p161 = scmp.ne.s32.totalorder %s150, %s151
    %p162 = scmp.eq.s32.totalorder %s16, 0
    %p163 = por %p161, %p162
    %p164 = scmp.ne.s32.totalorder %s150, %s151
    %p165 = scmp.eq.s32.totalorder %s17, 3
    %p166 = por %p164, %p165
    %p168 = scmp.ne.s32.totalorder %s151, %s167
    %p169 = scmp.eq.s32.totalorder %s17, 0
    %p170 = por %p168, %p169
    %p171 = scmp.le.s32.totalorder 1, %s11
    %p172 = scmp.lt.s32.totalorder %s11, 5
    %p173 = pnand %p171, %p172
    %p174 = pneg %p173
    // Predicated region
    $region9: #{rpn_head_forward.1} parent=5 // pred_check
      _
    $region10: #{rpn_head_forward.1} parent=5 // pred_check_branch
      %176 = sbr.rel (%p173) target = $region12
    $region11: #{rpn_head_forward.1} parent=5 // pred_region
      %s177 = ssub.s32 %s11, 1
      // Predicated region
      $region13: #{rpn_head_forward.1} parent=11 // pred_check
        %p178 = pneg %p72
      $region14: #{rpn_head_forward.1} parent=11 // pred_check_branch
        %180 = sbr.rel (%p178) target = $region16
      $region15: #{rpn_head_forward.1} parent=11 // pred_region
        _
      $region16: #{rpn_head_forward.1} parent=11 // pred_fallthru
        _
      // Predicated region
      $region17: #{rpn_head_forward.1} parent=11 // pred_check
        %p181 = pneg %p93
      $region18: #{rpn_head_forward.1} parent=11 // pred_check_branch
        %183 = sbr.rel (%p181) target = $region20
      $region19: #{rpn_head_forward.1} parent=11 // pred_region
        _
      $region20: #{rpn_head_forward.1} parent=11 // pred_fallthru
        _
      // Predicated region
      $region21: #{rpn_head_forward.1} parent=11 // pred_check
        %p184 = pneg %p114
      $region22: #{rpn_head_forward.1} parent=11 // pred_check_branch
        %186 = sbr.rel (%p184) target = $region24
      $region23: #{rpn_head_forward.1} parent=11 // pred_region
        _
      $region24: #{rpn_head_forward.1} parent=11 // pred_fallthru
        _
      // Predicated region
      $region25: #{rpn_head_forward.1} parent=11 // pred_check
        %p187 = pneg %p135
      $region26: #{rpn_head_forward.1} parent=11 // pred_check_branch
        %189 = sbr.rel (%p187) target = $region28
      $region27: #{rpn_head_forward.1} parent=11 // pred_region
        _
      $region28: #{rpn_head_forward.1} parent=11 // pred_fallthru
        _
    $region12: #{rpn_head_forward.1} parent=5 // pred_fallthru
      _
    %p190 = scmp.lt.s32.totalorder %s11, 4
    // Predicated region
    $region29: #{rpn_head_forward.1} parent=5 // pred_check
      %p191 = pneg %p190
    $region30: #{rpn_head_forward.1} parent=5 // pred_check_branch
      %193 = sbr.rel (%p191) target = $region32
    $region31: #{rpn_head_forward.1} parent=5 // pred_region
      // Predicated region
      $region33: #{rpn_head_forward.1} parent=31 // pred_check
        %p194 = pneg %p45
      $region34: #{rpn_head_forward.1} parent=31 // pred_check_branch
        %196 = sbr.rel (%p194) target = $region36
      $region35: #{rpn_head_forward.1} parent=31 // pred_region
        %p197 = scmp.lt.s32.totalorder %s18, 1
        %s198 = scalar_select %p197, %s18, 1
        %p199 = scmp.lt.s32.totalorder %s19, 1
        %s200 = scalar_select %p199, %s19, 1
        %s201 = smul.addr %s200, 60
        %s202 = smul.addr %s198, 120
        %s203 = sadd.s32 %s201, %s202
        %s204 = smul.addr %s203, 4
        %s205 = scalar_lea.vmem %s0, %s204
      $region36: #{rpn_head_forward.1} parent=31 // pred_fallthru
        _
    $region32: #{rpn_head_forward.1} parent=5 // pred_fallthru
      _
    %p206 = scmp.le.s32.totalorder 1, %s11
    %p207 = scmp.lt.s32.totalorder %s11, 5
    %p208 = pnand %p206, %p207
    %p209 = pneg %p208
    // Predicated region
    $region37: #{rpn_head_forward.1} parent=5 // pred_check
      _
    $region38: #{rpn_head_forward.1} parent=5 // pred_check_branch
      %211 = sbr.rel (%p208) target = $region40
    $region39: #{rpn_head_forward.1} parent=5 // pred_region
      %s212 = ssub.s32 %s11, 1
      %p213 = scmp.lt.s32.totalorder %s20, 1
      %s214 = scalar_select %p213, %s20, 1
      %p215 = scmp.lt.s32.totalorder %s21, 1
      %s216 = scalar_select %p215, %s21, 1
      %s217 = smul.addr %s216, 60
      %s218 = smul.addr %s214, 120
      %s219 = sadd.s32 %s217, %s218
      %s220 = smul.addr %s219, 4
      %s221 = scalar_lea.vmem %s0, %s220
      %p222 = pneg %p51
      %p223 = pneg %p48
      %p224 = pneg %p72
      %p225 = pneg %p69
      %p226 = pneg %p93
      %p227 = pneg %p90
      %p228 = pneg %p114
      %p229 = pneg %p111
      %p230 = pneg %p135
      %p231 = pneg %p132
      %p232 = pneg %p163
      %p233 = pneg %p160
      %s234 = smul.u32 16, %s21
      %p235 = scmp.lt.s32.totalorder %s20, 1
      %s236 = scalar_select %p235, %s20, 1
      %p237 = scmp.lt.s32.totalorder %s234, 31
      %s238 = scalar_select %p237, %s234, 31
      %s239 = smul.addr %s236, 32
      %s240 = sadd.s32 %s238, %s239
      %s241 = smul.addr %s240, 8
      %s242 = scalar_lea.vmem %s5, %s241
      %p243 = scmp.lt.s32.totalorder %s20, 1
      %s244 = scalar_select %p243, %s20, 1
      %p245 = scmp.lt.s32.totalorder %s21, 1
      %s246 = scalar_select %p245, %s21, 1
      %s247 = smul.addr %s246, 60
      %s248 = smul.addr %s244, 120
      %s249 = sadd.s32 %s247, %s248
      %s250 = smul.addr %s249, 4
      %s251 = scalar_lea.vmem %s0, %s250
      %s252 = smul.u32 16, %s21
      %p253 = scmp.lt.s32.totalorder %s20, 1
      %s254 = scalar_select %p253, %s20, 1
      %p255 = scmp.lt.s32.totalorder %s252, 31
      %s256 = scalar_select %p255, %s252, 31
      %s257 = smul.addr %s254, 32
      %s258 = sadd.s32 %s256, %s257
      %s259 = smul.addr %s258, 8
      %s260 = scalar_lea.vmem %s5, %s259
      %s261 = smul.u32 16, %s21
      %v263 = vld [vmem:[%s251] sm:$0xf]
      %v264 = vld [vmem:[%s251 + $0x4] sm:$0xf]
      %v265 = vld [vmem:[%s251 + $0x8] sm:$0xf]
      %v266 = vld [vmem:[%s251 + $0xc] sm:$0xf]
      %v267 = vld [vmem:[%s251 + $0x10] sm:$0xf]
      %v268 = vld [vmem:[%s251 + $0x14] sm:$0xf]
      %v269 = vld [vmem:[%s251 + $0x18] sm:$0xf]
      %v270 = vld [vmem:[%s251 + $0x1c] sm:$0xf]
      %v271 = vld [vmem:[%s251 + $0x20] sm:$0xf]
      %v272 = vld [vmem:[%s251 + $0x24] sm:$0xf]
      %v273 = vld [vmem:[%s251 + $0x28] sm:$0xf]
      %v274 = vld [vmem:[%s251 + $0x2c] sm:$0xf]
      %v275 = vld [vmem:[%s251 + $0x30] sm:$0xf]
      %v276 = vld [vmem:[%s251 + $0x34] sm:$0xf]
      %v277 = vld [vmem:[%s251 + $0x38] sm:$0xf]
      %v278 = vld [vmem:[%s251 + $0x3c] sm:$0xf]
      %v279 = vld [vmem:[%s1] sm:$0xf]
      %v280 = vld [vmem:[%s251 + $0x40] sm:$0xf]
      %v281 = vld [vmem:[%s251 + $0x44] sm:$0xf]
      %s282 = scalar_lea.vmem %s1, 4
      %v283 = vld [vmem:[%s282] sm:$0xf]
      %v300 = vunpack.c.l.b16 %v265
      %v301 = vunpack.c.l.b16 %v266
      %v302 = vunpack.c.l.b16 %v267
      %v303 = vunpack.c.l.b16 %v268
      %v304 = vunpack.c.l.b16 %v269
      %v305 = vunpack.c.l.b16 %v270
      %v306 = vunpack.c.l.b16 %v271
      %v307 = vunpack.c.l.b16 %v272
      %v308 = vunpack.c.l.b16 %v273
      %v309 = vunpack.c.l.b16 %v274
      %v310 = vunpack.c.l.b16 %v275
      %v311 = vunpack.c.l.b16 %v276
      %v312 = vunpack.c.l.b16 %v277
      %v313 = vunpack.c.l.b16 %v278
      %v314 = vunpack.c.l.b16 %v280
      %v315 = vunpack.c.l.b16 %v281
      %v316 = vpack.c.b16 %v301, %v300
      %v317 = vpack.c.b16 %v303, %v302
      %v318 = vpack.c.b16 %v305, %v304
      %v319 = vpack.c.b16 %v307, %v306
      %v320 = vpack.c.b16 %v309, %v308
      %v321 = vpack.c.b16 %v311, %v310
      %v322 = vpack.c.b16 %v313, %v312
      %v323 = vpack.c.b16 %v315, %v314
      %vm324 = vcmask 64512
      %v326 = vsel %vm324, %v316, 0
      %v329 = vsel %vm324, %v317, 0
      %v332 = vsel %vm324, %v318, 0
      %v335 = vsel %vm324, %v319, 0
      %v338 = vsel %vm324, %v320, 0
      %v341 = vsel %vm324, %v321, 0
      %v344 = vsel %vm324, %v322, 0
      %v347 = vsel %vm324, %v323, 0
      %vm349 = vcmask 1043456
      %v351 = vsel %vm349, %v283, 0
      %353 = vmatprep.subr.bf16.mxu0 0
      %354 = vmatpush1.bf16.msra.mxu0 0
      %355 = vmatprep.subr.bf16.mxu0 0
      %356 = vmatpush1.bf16.msra.mxu0 0
      %357 = vmatprep.subr.bf16.mxu0 0
      %358 = vmatpush1.bf16.msra.mxu0 0
      %359 = vmatprep.subr.bf16.mxu0 0
      %360 = vmatpush1.bf16.msra.mxu0 0
      %361 = vmatprep.subr.bf16.mxu0 0
      %362 = vmatpush1.bf16.msra.mxu0 0
      %363 = vmatprep.subr.bf16.mxu0 0
      %364 = vmatpush1.bf16.msra.mxu0 0
      %365 = vmatprep.subr.bf16.mxu0 0
      %366 = vmatpush1.bf16.msra.mxu0 0
      %367 = vmatprep.subr.bf16.mxu0 0
      %368 = vmatpush1.bf16.msra.mxu0 %v351
      %369 = vmatprep.subr.bf16.mxu0 0
      %370 = vmatpush2.bf16.msra.mxu0 0
      %371 = vmatprep.subr.bf16.mxu0 0
      %372 = vmatpush2.bf16.msra.mxu0 0
      %373 = vmatprep.subr.bf16.mxu0 0
      %374 = vmatpush2.bf16.msra.mxu0 0
      %375 = vmatprep.subr.bf16.mxu0 0
      %376 = vmatpush2.bf16.msra.mxu0 0
      %377 = vmatprep.subr.bf16.mxu0 0
      %378 = vmatpush2.bf16.msra.mxu0 0
      %379 = vmatprep.subr.bf16.mxu0 0
      %380 = vmatpush2.bf16.msra.mxu0 0
      %381 = vmatprep.subr.bf16.mxu0 0
      %382 = vmatpush2.bf16.msra.mxu0 0
      %383 = vmatprep.subr.bf16.mxu0 0
      %384 = vmatpush2.bf16.msra.mxu0 0
      %385 = vmatprep.mubr.bf16.mxu0 0
      %386 = vmatmul.mubr.bf16.gmra.mxu0 %v326
      %v387 = vpop.f32.mrf.mxu0
      %v388 = vadd.f32 0.0, %v387
      %v389 = vpop.f32.mrf.mxu0
      %v390 = vpop.f32.mrf.mxu0
      %v391 = vadd.f32 0.0, %v390
      %v392 = vpop.f32.mrf.mxu0
      %393 = vmatprep.mubr.bf16.mxu0 0
      %394 = vmatmul.mubr.bf16.gmra.mxu0 %v329
      %v395 = vpop.f32.mrf.mxu0
      %v396 = vadd.f32 0.0, %v395
      %v397 = vpop.f32.mrf.mxu0
      %v398 = vpop.f32.mrf.mxu0
      %v399 = vadd.f32 0.0, %v398
      %v400 = vpop.f32.mrf.mxu0
      %401 = vmatprep.mubr.bf16.mxu0 0
      %402 = vmatmul.mubr.bf16.gmra.mxu0 %v332
      %v403 = vpop.f32.mrf.mxu0
      %v404 = vadd.f32 0.0, %v403
      %v405 = vpop.f32.mrf.mxu0
      %v406 = vpop.f32.mrf.mxu0
      %v407 = vadd.f32 0.0, %v406
      %v408 = vpop.f32.mrf.mxu0
      %409 = vmatprep.mubr.bf16.mxu0 0
      %410 = vmatmul.mubr.bf16.gmra.mxu0 %v335
      %v411 = vpop.f32.mrf.mxu0
      %v412 = vadd.f32 0.0, %v411
      %v413 = vpop.f32.mrf.mxu0
      %v414 = vpop.f32.mrf.mxu0
      %v415 = vadd.f32 0.0, %v414
      %v416 = vpop.f32.mrf.mxu0
      %417 = vmatprep.mubr.bf16.mxu0 0
      %418 = vmatmul.mubr.bf16.gmra.mxu0 %v338
      %v419 = vpop.f32.mrf.mxu0
      %v420 = vadd.f32 0.0, %v419
      %v421 = vpop.f32.mrf.mxu0
      %v422 = vpop.f32.mrf.mxu0
      %v423 = vadd.f32 0.0, %v422
      %v424 = vpop.f32.mrf.mxu0
      %425 = vmatprep.mubr.bf16.mxu0 0
      %426 = vmatmul.mubr.bf16.gmra.mxu0 %v341
      %v427 = vpop.f32.mrf.mxu0
      %v428 = vadd.f32 0.0, %v427
      %v429 = vpop.f32.mrf.mxu0
      %v430 = vpop.f32.mrf.mxu0
      %v431 = vadd.f32 0.0, %v430
      %v432 = vpop.f32.mrf.mxu0
      %433 = vmatprep.mubr.bf16.mxu0 0
      %434 = vmatmul.mubr.bf16.gmra.mxu0 %v344
      %v435 = vpop.f32.mrf.mxu0
      %v436 = vadd.f32 0.0, %v435
      %v437 = vpop.f32.mrf.mxu0
      %v438 = vpop.f32.mrf.mxu0
      %v439 = vadd.f32 0.0, %v438
      %v440 = vpop.f32.mrf.mxu0
      %441 = vmatprep.mubr.bf16.mxu0 0
      %442 = vmatmul.mubr.bf16.gmra.mxu0 %v347
      %v443 = vpop.f32.mrf.mxu0
      %v444 = vadd.f32 0.0, %v443
      %v445 = vpop.f32.mrf.mxu0
      %v446 = vpop.f32.mrf.mxu0
      %v447 = vadd.f32 0.0, %v446
      %v448 = vpop.f32.mrf.mxu0
      %449 = vdwg.mxu0
      %v452 = vunpack.c.l.b16 %v263
      %v453 = vunpack.c.l.b16 %v264
      %v454 = vpack.c.b16 %v453, %v452
      %v456 = vsel %vm324, %v454, 0
      %v459 = vsel %vm349, %v279, 0
      %461 = vmatprep.subr.bf16.mxu0 0
      %462 = vmatpush1.bf16.msra.mxu0 0
      %463 = vmatprep.subr.bf16.mxu0 0
      %464 = vmatpush1.bf16.msra.mxu0 0
      %465 = vmatprep.subr.bf16.mxu0 0
      %466 = vmatpush1.bf16.msra.mxu0 0
      %467 = vmatprep.subr.bf16.mxu0 0
      %468 = vmatpush1.bf16.msra.mxu0 0
      %469 = vmatprep.subr.bf16.mxu0 0
      %470 = vmatpush1.bf16.msra.mxu0 0
      %471 = vmatprep.subr.bf16.mxu0 0
      %472 = vmatpush1.bf16.msra.mxu0 0
      %473 = vmatprep.subr.bf16.mxu0 0
      %474 = vmatpush1.bf16.msra.mxu0 0
      %475 = vmatprep.subr.bf16.mxu0 0
      %476 = vmatpush1.bf16.msra.mxu0 %v459
      %477 = vmatprep.subr.bf16.mxu0 0
      %478 = vmatpush2.bf16.msra.mxu0 0
      %479 = vmatprep.subr.bf16.mxu0 0
      %480 = vmatpush2.bf16.msra.mxu0 0
      %481 = vmatprep.subr.bf16.mxu0 0
      %482 = vmatpush2.bf16.msra.mxu0 0
      %483 = vmatprep.subr.bf16.mxu0 0
      %484 = vmatpush2.bf16.msra.mxu0 0
      %485 = vmatprep.subr.bf16.mxu0 0
      %486 = vmatpush2.bf16.msra.mxu0 0
      %487 = vmatprep.subr.bf16.mxu0 0
      %488 = vmatpush2.bf16.msra.mxu0 0
      %489 = vmatprep.subr.bf16.mxu0 0
      %490 = vmatpush2.bf16.msra.mxu0 0
      %491 = vmatprep.subr.bf16.mxu0 0
      %492 = vmatpush2.bf16.msra.mxu0 0
      %493 = vmatprep.mubr.bf16.mxu0 0
      %494 = vmatmul.mubr.bf16.gmra.mxu0 %v456
      %v495 = vpop.f32.mrf.mxu0
      %v496 = vadd.f32 %v388, %v495
      %v497 = vpop.f32.mrf.mxu0
      %v498 = vpop.f32.mrf.mxu0
      %v499 = vadd.f32 %v391, %v498
      %v500 = vpop.f32.mrf.mxu0
      %501 = vmatprep.mubr.bf16.mxu0 0
      %502 = vmatmul.mubr.bf16.gmra.mxu0 %v326
      %v503 = vpop.f32.mrf.mxu0
      %v504 = vadd.f32 %v396, %v503
      %v505 = vpop.f32.mrf.mxu0
      %v506 = vpop.f32.mrf.mxu0
      %v507 = vadd.f32 %v399, %v506
      %v508 = vpop.f32.mrf.mxu0
      %509 = vmatprep.mubr.bf16.mxu0 0
      %510 = vmatmul.mubr.bf16.gmra.mxu0 %v329
      %v511 = vpop.f32.mrf.mxu0
      %v512 = vadd.f32 %v404, %v511
      %v513 = vpop.f32.mrf.mxu0
      %v514 = vpop.f32.mrf.mxu0
      %v515 = vadd.f32 %v407, %v514
      %v516 = vpop.f32.mrf.mxu0
      %517 = vmatprep.mubr.bf16.mxu0 0
      %518 = vmatmul.mubr.bf16.gmra.mxu0 %v332
      %v519 = vpop.f32.mrf.mxu0
      %v520 = vadd.f32 %v412, %v519
      %v521 = vpop.f32.mrf.mxu0
      %v522 = vpop.f32.mrf.mxu0
      %v523 = vadd.f32 %v415, %v522
      %v524 = vpop.f32.mrf.mxu0
      %525 = vmatprep.mubr.bf16.mxu0 0
      %526 = vmatmul.mubr.bf16.gmra.mxu0 %v335
      %v527 = vpop.f32.mrf.mxu0
      %v528 = vadd.f32 %v420, %v527
      %v529 = vpop.f32.mrf.mxu0
      %v530 = vpop.f32.mrf.mxu0
      %v531 = vadd.f32 %v423, %v530
      %v532 = vpop.f32.mrf.mxu0
      %533 = vmatprep.mubr.bf16.mxu0 0
      %534 = vmatmul.mubr.bf16.gmra.mxu0 %v338
      %v535 = vpop.f32.mrf.mxu0
      %v536 = vadd.f32 %v428, %v535
      %v537 = vpop.f32.mrf.mxu0
      %v538 = vpop.f32.mrf.mxu0
      %v539 = vadd.f32 %v431, %v538
      %v540 = vpop.f32.mrf.mxu0
      %541 = vmatprep.mubr.bf16.mxu0 0
      %542 = vmatmul.mubr.bf16.gmra.mxu0 %v341
      %v543 = vpop.f32.mrf.mxu0
      %v544 = vadd.f32 %v436, %v543
      %v545 = vpop.f32.mrf.mxu0
      %v546 = vpop.f32.mrf.mxu0
      %v547 = vadd.f32 %v439, %v546
      %v548 = vpop.f32.mrf.mxu0
      %549 = vmatprep.mubr.bf16.mxu0 0
      %550 = vmatmul.mubr.bf16.gmra.mxu0 %v344
      %v551 = vpop.f32.mrf.mxu0
      %v552 = vadd.f32 %v444, %v551
      %v553 = vpop.f32.mrf.mxu0
      %v554 = vpop.f32.mrf.mxu0
      %v555 = vadd.f32 %v447, %v554
      %v556 = vpop.f32.mrf.mxu0
      %557 = vdwg.mxu0
      %v558 = vld [vmem:[%s251 + $0x10] sm:$0xf]
      %v559 = vld [vmem:[%s251 + $0x14] sm:$0xf]
      %v560 = vld [vmem:[%s251 + $0x18] sm:$0xf]
      %v561 = vld [vmem:[%s251 + $0x1c] sm:$0xf]
      %v562 = vld [vmem:[%s251 + $0x20] sm:$0xf]
      %v563 = vld [vmem:[%s251 + $0x24] sm:$0xf]
      %v564 = vld [vmem:[%s251 + $0x28] sm:$0xf]
      %v565 = vld [vmem:[%s251 + $0x2c] sm:$0xf]
      %v566 = vld [vmem:[%s251 + $0x30] sm:$0xf]
      %v567 = vld [vmem:[%s251 + $0x34] sm:$0xf]
      %v568 = vld [vmem:[%s251 + $0x38] sm:$0xf]
      %v569 = vld [vmem:[%s251 + $0x3c] sm:$0xf]
      %v570 = vld [vmem:[%s251 + $0x40] sm:$0xf]
      %v571 = vld [vmem:[%s251 + $0x44] sm:$0xf]
      %v572 = vld [vmem:[%s251 + $0x48] sm:$0xf]
      %v573 = vld [vmem:[%s251 + $0x4c] sm:$0xf]
      %s574 = scalar_lea.vmem %s1, 8
      %v575 = vld [vmem:[%s574] sm:$0xf]
      %v592 = vunpack.c.l.b16 %v558
      %v593 = vunpack.c.l.b16 %v559
      %v594 = vunpack.c.l.b16 %v560
      %v595 = vunpack.c.l.b16 %v561
      %v596 = vunpack.c.l.b16 %v562
      %v597 = vunpack.c.l.b16 %v563
      %v598 = vunpack.c.l.b16 %v564
      %v599 = vunpack.c.l.b16 %v565
      %v600 = vunpack.c.l.b16 %v566
      %v601 = vunpack.c.l.b16 %v567
      %v602 = vunpack.c.l.b16 %v568
      %v603 = vunpack.c.l.b16 %v569
      %v604 = vunpack.c.l.b16 %v570
      %v605 = vunpack.c.l.b16 %v571
      %v606 = vunpack.c.l.b16 %v572
      %v607 = vunpack.c.l.b16 %v573
      %v608 = vpack.c.b16 %v593, %v592
      %v609 = vpack.c.b16 %v595, %v594
      %v610 = vpack.c.b16 %v597, %v596
      %v611 = vpack.c.b16 %v599, %v598
      %v612 = vpack.c.b16 %v601, %v600
      %v613 = vpack.c.b16 %v603, %v602
      %v614 = vpack.c.b16 %v605, %v604
      %v615 = vpack.c.b16 %v607, %v606
      %v617 = vsel %vm324, %v608, 0
      %v620 = vsel %vm324, %v609, 0
      %v623 = vsel %vm324, %v610, 0
      %v626 = vsel %vm324, %v611, 0
      %v629 = vsel %vm324, %v612, 0
      %v632 = vsel %vm324, %v613, 0
      %v635 = vsel %vm324, %v614, 0
      %v638 = vsel %vm324, %v615, 0
      %v641 = vsel %vm349, %v575, 0
      %643 = vmatprep.subr.bf16.mxu0 0
      %644 = vmatpush1.bf16.msra.mxu0 0
      %645 = vmatprep.subr.bf16.mxu0 0
      %646 = vmatpush1.bf16.msra.mxu0 0
      %647 = vmatprep.subr.bf16.mxu0 0
      %648 = vmatpush1.bf16.msra.mxu0 0
      %649 = vmatprep.subr.bf16.mxu0 0
      %650 = vmatpush1.bf16.msra.mxu0 0
      %651 = vmatprep.subr.bf16.mxu0 0
      %652 = vmatpush1.bf16.msra.mxu0 0
      %653 = vmatprep.subr.bf16.mxu0 0
      %654 = vmatpush1.bf16.msra.mxu0 0
      %655 = vmatprep.subr.bf16.mxu0 0
      %656 = vmatpush1.bf16.msra.mxu0 0
      %657 = vmatprep.subr.bf16.mxu0 0
      %658 = vmatpush1.bf16.msra.mxu0 %v641
      %659 = vmatprep.subr.bf16.mxu0 0
      %660 = vmatpush2.bf16.msra.mxu0 0
      %661 = vmatprep.subr.bf16.mxu0 0
      %662 = vmatpush2.bf16.msra.mxu0 0
      %663 = vmatprep.subr.bf16.mxu0 0
      %664 = vmatpush2.bf16.msra.mxu0 0
      %665 = vmatprep.subr.bf16.mxu0 0
      %666 = vmatpush2.bf16.msra.mxu0 0
      %667 = vmatprep.subr.bf16.mxu0 0
      %668 = vmatpush2.bf16.msra.mxu0 0
      %669 = vmatprep.subr.bf16.mxu0 0
      %670 = vmatpush2.bf16.msra.mxu0 0
      %671 = vmatprep.subr.bf16.mxu0 0
      %672 = vmatpush2.bf16.msra.mxu0 0
      %673 = vmatprep.subr.bf16.mxu0 0
      %674 = vmatpush2.bf16.msra.mxu0 0
      %675 = vmatprep.mubr.bf16.mxu0 0
      %676 = vmatmul.mubr.bf16.gmra.mxu0 %v617
      %v677 = vpop.f32.mrf.mxu0
      %v678 = vadd.f32 0.0, %v677
      %v679 = vpop.f32.mrf.mxu0
      %v680 = vpop.f32.mrf.mxu0
      %v681 = vadd.f32 0.0, %v680
      %v682 = vpop.f32.mrf.mxu0
      %683 = vmatprep.mubr.bf16.mxu0 0
      %684 = vmatmul.mubr.bf16.gmra.mxu0 %v620
      %v685 = vpop.f32.mrf.mxu0
      %v686 = vadd.f32 0.0, %v685
      %v687 = vpop.f32.mrf.mxu0
      %v688 = vpop.f32.mrf.mxu0
      %v689 = vadd.f32 0.0, %v688
      %v690 = vpop.f32.mrf.mxu0
      %691 = vmatprep.mubr.bf16.mxu0 0
      %692 = vmatmul.mubr.bf16.gmra.mxu0 %v623
      %v693 = vpop.f32.mrf.mxu0
      %v694 = vadd.f32 0.0, %v693
      %v695 = vpop.f32.mrf.mxu0
      %v696 = vpop.f32.mrf.mxu0
      %v697 = vadd.f32 0.0, %v696
      %v698 = vpop.f32.mrf.mxu0
      %699 = vmatprep.mubr.bf16.mxu0 0
      %700 = vmatmul.mubr.bf16.gmra.mxu0 %v626
      %v701 = vpop.f32.mrf.mxu0
      %v702 = vadd.f32 0.0, %v701
      %v703 = vpop.f32.mrf.mxu0
      %v704 = vpop.f32.mrf.mxu0
      %v705 = vadd.f32 0.0, %v704
      %v706 = vpop.f32.mrf.mxu0
      %707 = vmatprep.mubr.bf16.mxu0 0
      %708 = vmatmul.mubr.bf16.gmra.mxu0 %v629
      %v709 = vpop.f32.mrf.mxu0
      %v710 = vadd.f32 0.0, %v709
      %v711 = vpop.f32.mrf.mxu0
      %v712 = vpop.f32.mrf.mxu0
      %v713 = vadd.f32 0.0, %v712
      %v714 = vpop.f32.mrf.mxu0
      %715 = vmatprep.mubr.bf16.mxu0 0
      %716 = vmatmul.mubr.bf16.gmra.mxu0 %v632
      %v717 = vpop.f32.mrf.mxu0
      %v718 = vadd.f32 0.0, %v717
      %v719 = vpop.f32.mrf.mxu0
      %v720 = vpop.f32.mrf.mxu0
      %v721 = vadd.f32 0.0, %v720
      %v722 = vpop.f32.mrf.mxu0
      %723 = vmatprep.mubr.bf16.mxu0 0
      %724 = vmatmul.mubr.bf16.gmra.mxu0 %v635
      %v725 = vpop.f32.mrf.mxu0
      %v726 = vadd.f32 0.0, %v725
      %v727 = vpop.f32.mrf.mxu0
      %v728 = vpop.f32.mrf.mxu0
      %v729 = vadd.f32 0.0, %v728
      %v730 = vpop.f32.mrf.mxu0
      %731 = vmatprep.mubr.bf16.mxu0 0
      %732 = vmatmul.mubr.bf16.gmra.mxu0 %v638
      %v733 = vpop.f32.mrf.mxu0
      %v734 = vadd.f32 0.0, %v733
      %v735 = vpop.f32.mrf.mxu0
      %v736 = vpop.f32.mrf.mxu0
      %v737 = vadd.f32 0.0, %v736
      %v738 = vpop.f32.mrf.mxu0
      %739 = vdwg.mxu0
      %v740 = vadd.f32 %v496, %v678
      %v741 = vadd.f32 %v499, %v681
      %v742 = vadd.f32 %v504, %v686
      %v743 = vadd.f32 %v507, %v689
      %v744 = vadd.f32 %v512, %v694
      %v745 = vadd.f32 %v515, %v697
      %v746 = vadd.f32 %v520, %v702
      %v747 = vadd.f32 %v523, %v705
      %v748 = vadd.f32 %v528, %v710
      %v749 = vadd.f32 %v531, %v713
      %v750 = vadd.f32 %v536, %v718
      %v751 = vadd.f32 %v539, %v721
      %v752 = vadd.f32 %v544, %v726
      %v753 = vadd.f32 %v547, %v729
      %v754 = vadd.f32 %v552, %v734
      %v755 = vadd.f32 %v555, %v737
      %s756 = scalar_lea.vmem %s251, 80
      %v757 = vld [vmem:[%s756] sm:$0xf]
      %v758 = vld [vmem:[%s756 + $0x4] sm:$0xf]
      %v759 = vld [vmem:[%s756 + $0x8] sm:$0xf]
      %v760 = vld [vmem:[%s756 + $0xc] sm:$0xf]
      %v761 = vld [vmem:[%s756 + $0x10] sm:$0xf]
      %v762 = vld [vmem:[%s756 + $0x14] sm:$0xf]
      %v763 = vld [vmem:[%s756 + $0x18] sm:$0xf]
      %v764 = vld [vmem:[%s756 + $0x1c] sm:$0xf]
      %v765 = vld [vmem:[%s756 + $0x20] sm:$0xf]
      %v766 = vld [vmem:[%s756 + $0x24] sm:$0xf]
      %v767 = vld [vmem:[%s756 + $0x28] sm:$0xf]
      %v768 = vld [vmem:[%s756 + $0x2c] sm:$0xf]
      %v769 = vld [vmem:[%s756 + $0x30] sm:$0xf]
      %v770 = vld [vmem:[%s756 + $0x34] sm:$0xf]
      %v771 = vld [vmem:[%s756 + $0x38] sm:$0xf]
      %v772 = vld [vmem:[%s756 + $0x3c] sm:$0xf]
      %s773 = scalar_lea.vmem %s1, 12
      %v774 = vld [vmem:[%s773] sm:$0xf]
      %v791 = vunpack.c.l.b16 %v757
      %v792 = vunpack.c.l.b16 %v758
      %v793 = vunpack.c.l.b16 %v759
      %v794 = vunpack.c.l.b16 %v760
      %v795 = vunpack.c.l.b16 %v761
      %v796 = vunpack.c.l.b16 %v762
      %v797 = vunpack.c.l.b16 %v763
      %v798 = vunpack.c.l.b16 %v764
      %v799 = vunpack.c.l.b16 %v765
      %v800 = vunpack.c.l.b16 %v766
      %v801 = vunpack.c.l.b16 %v767
      %v802 = vunpack.c.l.b16 %v768
      %v803 = vunpack.c.l.b16 %v769
      %v804 = vunpack.c.l.b16 %v770
      %v805 = vunpack.c.l.b16 %v771
      %v806 = vunpack.c.l.b16 %v772
      %v807 = vpack.c.b16 %v792, %v791
      %v808 = vpack.c.b16 %v794, %v793
      %v809 = vpack.c.b16 %v796, %v795
      %v810 = vpack.c.b16 %v798, %v797
      %v811 = vpack.c.b16 %v800, %v799
      %v812 = vpack.c.b16 %v802, %v801
      %v813 = vpack.c.b16 %v804, %v803
      %v814 = vpack.c.b16 %v806, %v805
      %v816 = vsel %vm324, %v807, 0
      %v819 = vsel %vm324, %v808, 0
      %v822 = vsel %vm324, %v809, 0
      %v825 = vsel %vm324, %v810, 0
      %v828 = vsel %vm324, %v811, 0
      %v831 = vsel %vm324, %v812, 0
      %v834 = vsel %vm324, %v813, 0
      %v837 = vsel %vm324, %v814, 0
      %v840 = vsel %vm349, %v774, 0
      %842 = vmatprep.subr.bf16.mxu0 0
      %843 = vmatpush1.bf16.msra.mxu0 0
      %844 = vmatprep.subr.bf16.mxu0 0
      %845 = vmatpush1.bf16.msra.mxu0 0
      %846 = vmatprep.subr.bf16.mxu0 0
      %847 = vmatpush1.bf16.msra.mxu0 0
      %848 = vmatprep.subr.bf16.mxu0 0
      %849 = vmatpush1.bf16.msra.mxu0 0
      %850 = vmatprep.subr.bf16.mxu0 0
      %851 = vmatpush1.bf16.msra.mxu0 0
      %852 = vmatprep.subr.bf16.mxu0 0
      %853 = vmatpush1.bf16.msra.mxu0 0
      %854 = vmatprep.subr.bf16.mxu0 0
      %855 = vmatpush1.bf16.msra.mxu0 0
      %856 = vmatprep.subr.bf16.mxu0 0
      %857 = vmatpush1.bf16.msra.mxu0 %v840
      %858 = vmatprep.subr.bf16.mxu0 0
      %859 = vmatpush2.bf16.msra.mxu0 0
      %860 = vmatprep.subr.bf16.mxu0 0
      %861 = vmatpush2.bf16.msra.mxu0 0
      %862 = vmatprep.subr.bf16.mxu0 0
      %863 = vmatpush2.bf16.msra.mxu0 0
      %864 = vmatprep.subr.bf16.mxu0 0
      %865 = vmatpush2.bf16.msra.mxu0 0
      %866 = vmatprep.subr.bf16.mxu0 0
      %867 = vmatpush2.bf16.msra.mxu0 0
      %868 = vmatprep.subr.bf16.mxu0 0
      %869 = vmatpush2.bf16.msra.mxu0 0
      %870 = vmatprep.subr.bf16.mxu0 0
      %871 = vmatpush2.bf16.msra.mxu0 0
      %872 = vmatprep.subr.bf16.mxu0 0
      %873 = vmatpush2.bf16.msra.mxu0 0
      %874 = vmatprep.mubr.bf16.mxu0 0
      %875 = vmatmul.mubr.bf16.gmra.mxu0 %v816
      %v876 = vpop.f32.mrf.mxu0
      %v877 = vadd.f32 0.0, %v876
      %v878 = vpop.f32.mrf.mxu0
      %v879 = vpop.f32.mrf.mxu0
      %v880 = vadd.f32 0.0, %v879
      %v881 = vpop.f32.mrf.mxu0
      %882 = vmatprep.mubr.bf16.mxu0 0
      %883 = vmatmul.mubr.bf16.gmra.mxu0 %v819
      %v884 = vpop.f32.mrf.mxu0
      %v885 = vadd.f32 0.0, %v884
      %v886 = vpop.f32.mrf.mxu0
      %v887 = vpop.f32.mrf.mxu0
      %v888 = vadd.f32 0.0, %v887
      %v889 = vpop.f32.mrf.mxu0
      %890 = vmatprep.mubr.bf16.mxu0 0
      %891 = vmatmul.mubr.bf16.gmra.mxu0 %v822
      %v892 = vpop.f32.mrf.mxu0
      %v893 = vadd.f32 0.0, %v892
      %v894 = vpop.f32.mrf.mxu0
      %v895 = vpop.f32.mrf.mxu0
      %v896 = vadd.f32 0.0, %v895
      %v897 = vpop.f32.mrf.mxu0
      %898 = vmatprep.mubr.bf16.mxu0 0
      %899 = vmatmul.mubr.bf16.gmra.mxu0 %v825
      %v900 = vpop.f32.mrf.mxu0
      %v901 = vadd.f32 0.0, %v900
      %v902 = vpop.f32.mrf.mxu0
      %v903 = vpop.f32.mrf.mxu0
      %v904 = vadd.f32 0.0, %v903
      %v905 = vpop.f32.mrf.mxu0
      %906 = vmatprep.mubr.bf16.mxu0 0
      %907 = vmatmul.mubr.bf16.gmra.mxu0 %v828
      %v908 = vpop.f32.mrf.mxu0
      %v909 = vadd.f32 0.0, %v908
      %v910 = vpop.f32.mrf.mxu0
      %v911 = vpop.f32.mrf.mxu0
      %v912 = vadd.f32 0.0, %v911
      %v913 = vpop.f32.mrf.mxu0
      %914 = vmatprep.mubr.bf16.mxu0 0
      %915 = vmatmul.mubr.bf16.gmra.mxu0 %v831
      %v916 = vpop.f32.mrf.mxu0
      %v917 = vadd.f32 0.0, %v916
      %v918 = vpop.f32.mrf.mxu0
      %v919 = vpop.f32.mrf.mxu0
      %v920 = vadd.f32 0.0, %v919
      %v921 = vpop.f32.mrf.mxu0
      %922 = vmatprep.mubr.bf16.mxu0 0
      %923 = vmatmul.mubr.bf16.gmra.mxu0 %v834
      %v924 = vpop.f32.mrf.mxu0
      %v925 = vadd.f32 0.0, %v924
      %v926 = vpop.f32.mrf.mxu0
      %v927 = vpop.f32.mrf.mxu0
      %v928 = vadd.f32 0.0, %v927
      %v929 = vpop.f32.mrf.mxu0
      %930 = vmatprep.mubr.bf16.mxu0 0
      %931 = vmatmul.mubr.bf16.gmra.mxu0 %v837
      %v932 = vpop.f32.mrf.mxu0
      %v933 = vadd.f32 0.0, %v932
      %v934 = vpop.f32.mrf.mxu0
      %v935 = vpop.f32.mrf.mxu0
      %v936 = vadd.f32 0.0, %v935
      %v937 = vpop.f32.mrf.mxu0
      %938 = vdwg.mxu0
      %v939 = vadd.f32 %v740, %v877
      %v940 = vadd.f32 %v741, %v880
      %v941 = vadd.f32 %v742, %v885
      %v942 = vadd.f32 %v743, %v888
      %v943 = vadd.f32 %v744, %v893
      %v944 = vadd.f32 %v745, %v896
      %v945 = vadd.f32 %v746, %v901
      %v946 = vadd.f32 %v747, %v904
      %v947 = vadd.f32 %v748, %v909
      %v948 = vadd.f32 %v749, %v912
      %v949 = vadd.f32 %v750, %v917
      %v950 = vadd.f32 %v751, %v920
      %v951 = vadd.f32 %v752, %v925
      %v952 = vadd.f32 %v753, %v928
      %v953 = vadd.f32 %v754, %v933
      %v954 = vadd.f32 %v755, %v936
      %v955 = vld [vmem:[%s756 + $0x8] sm:$0xf]
      %v956 = vld [vmem:[%s756 + $0xc] sm:$0xf]
      %v957 = vld [vmem:[%s756 + $0x10] sm:$0xf]
      %v958 = vld [vmem:[%s756 + $0x14] sm:$0xf]
      %v959 = vld [vmem:[%s756 + $0x18] sm:$0xf]
      %v960 = vld [vmem:[%s756 + $0x1c] sm:$0xf]
      %v961 = vld [vmem:[%s756 + $0x20] sm:$0xf]
      %v962 = vld [vmem:[%s756 + $0x24] sm:$0xf]
      %v963 = vld [vmem:[%s756 + $0x28] sm:$0xf]
      %v964 = vld [vmem:[%s756 + $0x2c] sm:$0xf]
      %v965 = vld [vmem:[%s756 + $0x30] sm:$0xf]
      %v966 = vld [vmem:[%s756 + $0x34] sm:$0xf]
      %v967 = vld [vmem:[%s756 + $0x38] sm:$0xf]
      %v968 = vld [vmem:[%s756 + $0x3c] sm:$0xf]
      %v969 = vld [vmem:[%s756 + $0x40] sm:$0xf]
      %v970 = vld [vmem:[%s756 + $0x44] sm:$0xf]
      %s971 = scalar_lea.vmem %s1, 16
      %v972 = vld [vmem:[%s971] sm:$0xf]
      %v989 = vunpack.c.l.b16 %v955
      %v990 = vunpack.c.l.b16 %v956
      %v991 = vunpack.c.l.b16 %v957
      %v992 = vunpack.c.l.b16 %v958
      %v993 = vunpack.c.l.b16 %v959
      %v994 = vunpack.c.l.b16 %v960
      %v995 = vunpack.c.l.b16 %v961
      %v996 = vunpack.c.l.b16 %v962
      %v997 = vunpack.c.l.b16 %v963
      %v998 = vunpack.c.l.b16 %v964
      %v999 = vunpack.c.l.b16 %v965
      %v1000 = vunpack.c.l.b16 %v966
      %v1001 = vunpack.c.l.b16 %v967
      %v1002 = vunpack.c.l.b16 %v968
      %v1003 = vunpack.c.l.b16 %v969
      %v1004 = vunpack.c.l.b16 %v970
      %v1005 = vpack.c.b16 %v990, %v989
      %v1006 = vpack.c.b16 %v992, %v991
      %v1007 = vpack.c.b16 %v994, %v993
      %v1008 = vpack.c.b16 %v996, %v995
      %v1009 = vpack.c.b16 %v998, %v997
      %v1010 = vpack.c.b16 %v1000, %v999
      %v1011 = vpack.c.b16 %v1002, %v1001
      %v1012 = vpack.c.b16 %v1004, %v1003
      %v1014 = vsel %vm324, %v1005, 0
      %v1017 = vsel %vm324, %v1006, 0
      %v1020 = vsel %vm324, %v1007, 0
      %v1023 = vsel %vm324, %v1008, 0
      %v1026 = vsel %vm324, %v1009, 0
      %v1029 = vsel %vm324, %v1010, 0
      %v1032 = vsel %vm324, %v1011, 0
      %v1035 = vsel %vm324, %v1012, 0
      %v1038 = vsel %vm349, %v972, 0
      %1040 = vmatprep.subr.bf16.mxu0 0
      %1041 = vmatpush1.bf16.msra.mxu0 0
      %1042 = vmatprep.subr.bf16.mxu0 0
      %1043 = vmatpush1.bf16.msra.mxu0 0
      %1044 = vmatprep.subr.bf16.mxu0 0
      %1045 = vmatpush1.bf16.msra.mxu0 0
      %1046 = vmatprep.subr.bf16.mxu0 0
      %1047 = vmatpush1.bf16.msra.mxu0 0
      %1048 = vmatprep.subr.bf16.mxu0 0
      %1049 = vmatpush1.bf16.msra.mxu0 0
      %1050 = vmatprep.subr.bf16.mxu0 0
      %1051 = vmatpush1.bf16.msra.mxu0 0
      %1052 = vmatprep.subr.bf16.mxu0 0
      %1053 = vmatpush1.bf16.msra.mxu0 0
      %1054 = vmatprep.subr.bf16.mxu0 0
      %1055 = vmatpush1.bf16.msra.mxu0 %v1038
      %1056 = vmatprep.subr.bf16.mxu0 0
      %1057 = vmatpush2.bf16.msra.mxu0 0
      %1058 = vmatprep.subr.bf16.mxu0 0
      %1059 = vmatpush2.bf16.msra.mxu0 0
      %1060 = vmatprep.subr.bf16.mxu0 0
      %1061 = vmatpush2.bf16.msra.mxu0 0
      %1062 = vmatprep.subr.bf16.mxu0 0
      %1063 = vmatpush2.bf16.msra.mxu0 0
      %1064 = vmatprep.subr.bf16.mxu0 0
      %1065 = vmatpush2.bf16.msra.mxu0 0
      %1066 = vmatprep.subr.bf16.mxu0 0
      %1067 = vmatpush2.bf16.msra.mxu0 0
      %1068 = vmatprep.subr.bf16.mxu0 0
      %1069 = vmatpush2.bf16.msra.mxu0 0
      %1070 = vmatprep.subr.bf16.mxu0 0
      %1071 = vmatpush2.bf16.msra.mxu0 0
      %1072 = vmatprep.mubr.bf16.mxu0 0
      %1073 = vmatmul.mubr.bf16.gmra.mxu0 %v1014
      %v1074 = vpop.f32.mrf.mxu0
      %v1075 = vadd.f32 0.0, %v1074
      %v1076 = vpop.f32.mrf.mxu0
      %v1077 = vpop.f32.mrf.mxu0
      %v1078 = vadd.f32 0.0, %v1077
      %v1079 = vpop.f32.mrf.mxu0
      %1080 = vmatprep.mubr.bf16.mxu0 0
      %1081 = vmatmul.mubr.bf16.gmra.mxu0 %v1017
      %v1082 = vpop.f32.mrf.mxu0
      %v1083 = vadd.f32 0.0, %v1082
      %v1084 = vpop.f32.mrf.mxu0
      %v1085 = vpop.f32.mrf.mxu0
      %v1086 = vadd.f32 0.0, %v1085
      %v1087 = vpop.f32.mrf.mxu0
      %1088 = vmatprep.mubr.bf16.mxu0 0
      %1089 = vmatmul.mubr.bf16.gmra.mxu0 %v1020
      %v1090 = vpop.f32.mrf.mxu0
      %v1091 = vadd.f32 0.0, %v1090
      %v1092 = vpop.f32.mrf.mxu0
      %v1093 = vpop.f32.mrf.mxu0
      %v1094 = vadd.f32 0.0, %v1093
      %v1095 = vpop.f32.mrf.mxu0
      %1096 = vmatprep.mubr.bf16.mxu0 0
      %1097 = vmatmul.mubr.bf16.gmra.mxu0 %v1023
      %v1098 = vpop.f32.mrf.mxu0
      %v1099 = vadd.f32 0.0, %v1098
      %v1100 = vpop.f32.mrf.mxu0
      %v1101 = vpop.f32.mrf.mxu0
      %v1102 = vadd.f32 0.0, %v1101
      %v1103 = vpop.f32.mrf.mxu0
      %1104 = vmatprep.mubr.bf16.mxu0 0
      %1105 = vmatmul.mubr.bf16.gmra.mxu0 %v1026
      %v1106 = vpop.f32.mrf.mxu0
      %v1107 = vadd.f32 0.0, %v1106
      %v1108 = vpop.f32.mrf.mxu0
      %v1109 = vpop.f32.mrf.mxu0
      %v1110 = vadd.f32 0.0, %v1109
      %v1111 = vpop.f32.mrf.mxu0
      %1112 = vmatprep.mubr.bf16.mxu0 0
      %1113 = vmatmul.mubr.bf16.gmra.mxu0 %v1029
      %v1114 = vpop.f32.mrf.mxu0
      %v1115 = vadd.f32 0.0, %v1114
      %v1116 = vpop.f32.mrf.mxu0
      %v1117 = vpop.f32.mrf.mxu0
      %v1118 = vadd.f32 0.0, %v1117
      %v1119 = vpop.f32.mrf.mxu0
      %1120 = vmatprep.mubr.bf16.mxu0 0
      %1121 = vmatmul.mubr.bf16.gmra.mxu0 %v1032
      %v1122 = vpop.f32.mrf.mxu0
      %v1123 = vadd.f32 0.0, %v1122
      %v1124 = vpop.f32.mrf.mxu0
      %v1125 = vpop.f32.mrf.mxu0
      %v1126 = vadd.f32 0.0, %v1125
      %v1127 = vpop.f32.mrf.mxu0
      %1128 = vmatprep.mubr.bf16.mxu0 0
      %1129 = vmatmul.mubr.bf16.gmra.mxu0 %v1035
      %v1130 = vpop.f32.mrf.mxu0
      %v1131 = vadd.f32 0.0, %v1130
      %v1132 = vpop.f32.mrf.mxu0
      %v1133 = vpop.f32.mrf.mxu0
      %v1134 = vadd.f32 0.0, %v1133
      %v1135 = vpop.f32.mrf.mxu0
      %1136 = vdwg.mxu0
      %v1137 = vadd.f32 %v939, %v1075
      %v1138 = vadd.f32 %v940, %v1078
      %v1139 = vadd.f32 %v941, %v1083
      %v1140 = vadd.f32 %v942, %v1086
      %v1141 = vadd.f32 %v943, %v1091
      %v1142 = vadd.f32 %v944, %v1094
      %v1143 = vadd.f32 %v945, %v1099
      %v1144 = vadd.f32 %v946, %v1102
      %v1145 = vadd.f32 %v947, %v1107
      %v1146 = vadd.f32 %v948, %v1110
      %v1147 = vadd.f32 %v949, %v1115
      %v1148 = vadd.f32 %v950, %v1118
      %v1149 = vadd.f32 %v951, %v1123
      %v1150 = vadd.f32 %v952, %v1126
      %v1151 = vadd.f32 %v953, %v1131
      %v1152 = vadd.f32 %v954, %v1134
      %v1153 = vld [vmem:[%s756 + $0x10] sm:$0xf]
      %v1154 = vld [vmem:[%s756 + $0x14] sm:$0xf]
      %v1155 = vld [vmem:[%s756 + $0x18] sm:$0xf]
      %v1156 = vld [vmem:[%s756 + $0x1c] sm:$0xf]
      %v1157 = vld [vmem:[%s756 + $0x20] sm:$0xf]
      %v1158 = vld [vmem:[%s756 + $0x24] sm:$0xf]
      %v1159 = vld [vmem:[%s756 + $0x28] sm:$0xf]
      %v1160 = vld [vmem:[%s756 + $0x2c] sm:$0xf]
      %v1161 = vld [vmem:[%s756 + $0x30] sm:$0xf]
      %v1162 = vld [vmem:[%s756 + $0x34] sm:$0xf]
      %v1163 = vld [vmem:[%s756 + $0x38] sm:$0xf]
      %v1164 = vld [vmem:[%s756 + $0x3c] sm:$0xf]
      %v1165 = vld [vmem:[%s756 + $0x40] sm:$0xf]
      %v1166 = vld [vmem:[%s756 + $0x44] sm:$0xf]
      %v1167 = vld [vmem:[%s756 + $0x48] sm:$0xf]
      %v1168 = vld [vmem:[%s756 + $0x4c] sm:$0xf]
      %s1169 = scalar_lea.vmem %s1, 20
      %v1170 = vld [vmem:[%s1169] sm:$0xf]
      %v1187 = vunpack.c.l.b16 %v1153
      %v1188 = vunpack.c.l.b16 %v1154
      %v1189 = vunpack.c.l.b16 %v1155
      %v1190 = vunpack.c.l.b16 %v1156
      %v1191 = vunpack.c.l.b16 %v1157
      %v1192 = vunpack.c.l.b16 %v1158
      %v1193 = vunpack.c.l.b16 %v1159
      %v1194 = vunpack.c.l.b16 %v1160
      %v1195 = vunpack.c.l.b16 %v1161
      %v1196 = vunpack.c.l.b16 %v1162
      %v1197 = vunpack.c.l.b16 %v1163
      %v1198 = vunpack.c.l.b16 %v1164
      %v1199 = vunpack.c.l.b16 %v1165
      %v1200 = vunpack.c.l.b16 %v1166
      %v1201 = vunpack.c.l.b16 %v1167
      %v1202 = vunpack.c.l.b16 %v1168
      %v1203 = vpack.c.b16 %v1188, %v1187
      %v1204 = vpack.c.b16 %v1190, %v1189
      %v1205 = vpack.c.b16 %v1192, %v1191
      %v1206 = vpack.c.b16 %v1194, %v1193
      %v1207 = vpack.c.b16 %v1196, %v1195
      %v1208 = vpack.c.b16 %v1198, %v1197
      %v1209 = vpack.c.b16 %v1200, %v1199
      %v1210 = vpack.c.b16 %v1202, %v1201
      %v1212 = vsel %vm324, %v1203, 0
      %v1215 = vsel %vm324, %v1204, 0
      %v1218 = vsel %vm324, %v1205, 0
      %v1221 = vsel %vm324, %v1206, 0
      %v1224 = vsel %vm324, %v1207, 0
      %v1227 = vsel %vm324, %v1208, 0
      %v1230 = vsel %vm324, %v1209, 0
      %v1233 = vsel %vm324, %v1210, 0
      %v1236 = vsel %vm349, %v1170, 0
      %1238 = vmatprep.subr.bf16.mxu0 0
      %1239 = vmatpush1.bf16.msra.mxu0 0
      %1240 = vmatprep.subr.bf16.mxu0 0
      %1241 = vmatpush1.bf16.msra.mxu0 0
      %1242 = vmatprep.subr.bf16.mxu0 0
      %1243 = vmatpush1.bf16.msra.mxu0 0
      %1244 = vmatprep.subr.bf16.mxu0 0
      %1245 = vmatpush1.bf16.msra.mxu0 0
      %1246 = vmatprep.subr.bf16.mxu0 0
      %1247 = vmatpush1.bf16.msra.mxu0 0
      %1248 = vmatprep.subr.bf16.mxu0 0
      %1249 = vmatpush1.bf16.msra.mxu0 0
      %1250 = vmatprep.subr.bf16.mxu0 0
      %1251 = vmatpush1.bf16.msra.mxu0 0
      %1252 = vmatprep.subr.bf16.mxu0 0
      %1253 = vmatpush1.bf16.msra.mxu0 %v1236
      %1254 = vmatprep.subr.bf16.mxu0 0
      %1255 = vmatpush2.bf16.msra.mxu0 0
      %1256 = vmatprep.subr.bf16.mxu0 0
      %1257 = vmatpush2.bf16.msra.mxu0 0
      %1258 = vmatprep.subr.bf16.mxu0 0
      %1259 = vmatpush2.bf16.msra.mxu0 0
      %1260 = vmatprep.subr.bf16.mxu0 0
      %1261 = vmatpush2.bf16.msra.mxu0 0
      %1262 = vmatprep.subr.bf16.mxu0 0
      %1263 = vmatpush2.bf16.msra.mxu0 0
      %1264 = vmatprep.subr.bf16.mxu0 0
      %1265 = vmatpush2.bf16.msra.mxu0 0
      %1266 = vmatprep.subr.bf16.mxu0 0
      %1267 = vmatpush2.bf16.msra.mxu0 0
      %1268 = vmatprep.subr.bf16.mxu0 0
      %1269 = vmatpush2.bf16.msra.mxu0 0
      %1270 = vmatprep.mubr.bf16.mxu0 0
      %1271 = vmatmul.mubr.bf16.gmra.mxu0 %v1212
      %v1272 = vpop.f32.mrf.mxu0
      %v1273 = vadd.f32 0.0, %v1272
      %v1274 = vpop.f32.mrf.mxu0
      %v1275 = vpop.f32.mrf.mxu0
      %v1276 = vadd.f32 0.0, %v1275
      %v1277 = vpop.f32.mrf.mxu0
      %1278 = vmatprep.mubr.bf16.mxu0 0
      %1279 = vmatmul.mubr.bf16.gmra.mxu0 %v1215
      %v1280 = vpop.f32.mrf.mxu0
      %v1281 = vadd.f32 0.0, %v1280
      %v1282 = vpop.f32.mrf.mxu0
      %v1283 = vpop.f32.mrf.mxu0
      %v1284 = vadd.f32 0.0, %v1283
      %v1285 = vpop.f32.mrf.mxu0
      %1286 = vmatprep.mubr.bf16.mxu0 0
      %1287 = vmatmul.mubr.bf16.gmra.mxu0 %v1218
      %v1288 = vpop.f32.mrf.mxu0
      %v1289 = vadd.f32 0.0, %v1288
      %v1290 = vpop.f32.mrf.mxu0
      %v1291 = vpop.f32.mrf.mxu0
      %v1292 = vadd.f32 0.0, %v1291
      %v1293 = vpop.f32.mrf.mxu0
      %1294 = vmatprep.mubr.bf16.mxu0 0
      %1295 = vmatmul.mubr.bf16.gmra.mxu0 %v1221
      %v1296 = vpop.f32.mrf.mxu0
      %v1297 = vadd.f32 0.0, %v1296
      %v1298 = vpop.f32.mrf.mxu0
      %v1299 = vpop.f32.mrf.mxu0
      %v1300 = vadd.f32 0.0, %v1299
      %v1301 = vpop.f32.mrf.mxu0
      %1302 = vmatprep.mubr.bf16.mxu0 0
      %1303 = vmatmul.mubr.bf16.gmra.mxu0 %v1224
      %v1304 = vpop.f32.mrf.mxu0
      %v1305 = vadd.f32 0.0, %v1304
      %v1306 = vpop.f32.mrf.mxu0
      %v1307 = vpop.f32.mrf.mxu0
      %v1308 = vadd.f32 0.0, %v1307
      %v1309 = vpop.f32.mrf.mxu0
      %1310 = vmatprep.mubr.bf16.mxu0 0
      %1311 = vmatmul.mubr.bf16.gmra.mxu0 %v1227
      %v1312 = vpop.f32.mrf.mxu0
      %v1313 = vadd.f32 0.0, %v1312
      %v1314 = vpop.f32.mrf.mxu0
      %v1315 = vpop.f32.mrf.mxu0
      %v1316 = vadd.f32 0.0, %v1315
      %v1317 = vpop.f32.mrf.mxu0
      %1318 = vmatprep.mubr.bf16.mxu0 0
      %1319 = vmatmul.mubr.bf16.gmra.mxu0 %v1230
      %v1320 = vpop.f32.mrf.mxu0
      %v1321 = vadd.f32 0.0, %v1320
      %v1322 = vpop.f32.mrf.mxu0
      %v1323 = vpop.f32.mrf.mxu0
      %v1324 = vadd.f32 0.0, %v1323
      %v1325 = vpop.f32.mrf.mxu0
      %1326 = vmatprep.mubr.bf16.mxu0 0
      %1327 = vmatmul.mubr.bf16.gmra.mxu0 %v1233
      %v1328 = vpop.f32.mrf.mxu0
      %v1329 = vadd.f32 0.0, %v1328
      %v1330 = vpop.f32.mrf.mxu0
      %v1331 = vpop.f32.mrf.mxu0
      %v1332 = vadd.f32 0.0, %v1331
      %v1333 = vpop.f32.mrf.mxu0
      %1334 = vdwg.mxu0
      %v1335 = vadd.f32 %v1137, %v1273
      %v1336 = vadd.f32 %v1138, %v1276
      %v1337 = vadd.f32 %v1139, %v1281
      %v1338 = vadd.f32 %v1140, %v1284
      %v1339 = vadd.f32 %v1141, %v1289
      %v1340 = vadd.f32 %v1142, %v1292
      %v1341 = vadd.f32 %v1143, %v1297
      %v1342 = vadd.f32 %v1144, %v1300
      %v1343 = vadd.f32 %v1145, %v1305
      %v1344 = vadd.f32 %v1146, %v1308
      %v1345 = vadd.f32 %v1147, %v1313
      %v1346 = vadd.f32 %v1148, %v1316
      %v1347 = vadd.f32 %v1149, %v1321
      %v1348 = vadd.f32 %v1150, %v1324
      %v1349 = vadd.f32 %v1151, %v1329
      %v1350 = vadd.f32 %v1152, %v1332
      %s1351 = scalar_lea.vmem %s251, 160
      %v1352 = vld [vmem:[%s1351] sm:$0xf]
      %v1353 = vld [vmem:[%s1351 + $0x4] sm:$0xf]
      %v1354 = vld [vmem:[%s1351 + $0x8] sm:$0xf]
      %v1355 = vld [vmem:[%s1351 + $0xc] sm:$0xf]
      %v1356 = vld [vmem:[%s1351 + $0x10] sm:$0xf]
      %v1357 = vld [vmem:[%s1351 + $0x14] sm:$0xf]
      %v1358 = vld [vmem:[%s1351 + $0x18] sm:$0xf]
      %v1359 = vld [vmem:[%s1351 + $0x1c] sm:$0xf]
      %v1360 = vld [vmem:[%s1351 + $0x20] sm:$0xf]
      %v1361 = vld [vmem:[%s1351 + $0x24] sm:$0xf]
      %v1362 = vld [vmem:[%s1351 + $0x28] sm:$0xf]
      %v1363 = vld [vmem:[%s1351 + $0x2c] sm:$0xf]
      %v1364 = vld [vmem:[%s1351 + $0x30] sm:$0xf]
      %v1365 = vld [vmem:[%s1351 + $0x34] sm:$0xf]
      %v1366 = vld [vmem:[%s1351 + $0x38] sm:$0xf]
      %v1367 = vld [vmem:[%s1351 + $0x3c] sm:$0xf]
      %s1368 = scalar_lea.vmem %s1, 24
      %v1369 = vld [vmem:[%s1368] sm:$0xf]
      %v1386 = vunpack.c.l.b16 %v1352
      %v1387 = vunpack.c.l.b16 %v1353
      %v1388 = vunpack.c.l.b16 %v1354
      %v1389 = vunpack.c.l.b16 %v1355
      %v1390 = vunpack.c.l.b16 %v1356
      %v1391 = vunpack.c.l.b16 %v1357
      %v1392 = vunpack.c.l.b16 %v1358
      %v1393 = vunpack.c.l.b16 %v1359
      %v1394 = vunpack.c.l.b16 %v1360
      %v1395 = vunpack.c.l.b16 %v1361
      %v1396 = vunpack.c.l.b16 %v1362
      %v1397 = vunpack.c.l.b16 %v1363
      %v1398 = vunpack.c.l.b16 %v1364
      %v1399 = vunpack.c.l.b16 %v1365
      %v1400 = vunpack.c.l.b16 %v1366
      %v1401 = vunpack.c.l.b16 %v1367
      %v1402 = vpack.c.b16 %v1387, %v1386
      %v1403 = vpack.c.b16 %v1389, %v1388
      %v1404 = vpack.c.b16 %v1391, %v1390
      %v1405 = vpack.c.b16 %v1393, %v1392
      %v1406 = vpack.c.b16 %v1395, %v1394
      %v1407 = vpack.c.b16 %v1397, %v1396
      %v1408 = vpack.c.b16 %v1399, %v1398
      %v1409 = vpack.c.b16 %v1401, %v1400
      %v1411 = vsel %vm324, %v1402, 0
      %v1414 = vsel %vm324, %v1403, 0
      %v1417 = vsel %vm324, %v1404, 0
      %v1420 = vsel %vm324, %v1405, 0
      %v1423 = vsel %vm324, %v1406, 0
      %v1426 = vsel %vm324, %v1407, 0
      %v1429 = vsel %vm324, %v1408, 0
      %v1432 = vsel %vm324, %v1409, 0
      %v1435 = vsel %vm349, %v1369, 0
      %1437 = vmatprep.subr.bf16.mxu0 0
      %1438 = vmatpush1.bf16.msra.mxu0 0
      %1439 = vmatprep.subr.bf16.mxu0 0
      %1440 = vmatpush1.bf16.msra.mxu0 0
      %1441 = vmatprep.subr.bf16.mxu0 0
      %1442 = vmatpush1.bf16.msra.mxu0 0
      %1443 = vmatprep.subr.bf16.mxu0 0
      %1444 = vmatpush1.bf16.msra.mxu0 0
      %1445 = vmatprep.subr.bf16.mxu0 0
      %1446 = vmatpush1.bf16.msra.mxu0 0
      %1447 = vmatprep.subr.bf16.mxu0 0
      %1448 = vmatpush1.bf16.msra.mxu0 0
      %1449 = vmatprep.subr.bf16.mxu0 0
      %1450 = vmatpush1.bf16.msra.mxu0 0
      %1451 = vmatprep.subr.bf16.mxu0 0
      %1452 = vmatpush1.bf16.msra.mxu0 %v1435
      %1453 = vmatprep.subr.bf16.mxu0 0
      %1454 = vmatpush2.bf16.msra.mxu0 0
      %1455 = vmatprep.subr.bf16.mxu0 0
      %1456 = vmatpush2.bf16.msra.mxu0 0
      %1457 = vmatprep.subr.bf16.mxu0 0
      %1458 = vmatpush2.bf16.msra.mxu0 0
      %1459 = vmatprep.subr.bf16.mxu0 0
      %1460 = vmatpush2.bf16.msra.mxu0 0
      %1461 = vmatprep.subr.bf16.mxu0 0
      %1462 = vmatpush2.bf16.msra.mxu0 0
      %1463 = vmatprep.subr.bf16.mxu0 0
      %1464 = vmatpush2.bf16.msra.mxu0 0
      %1465 = vmatprep.subr.bf16.mxu0 0
      %1466 = vmatpush2.bf16.msra.mxu0 0
      %1467 = vmatprep.subr.bf16.mxu0 0
      %1468 = vmatpush2.bf16.msra.mxu0 0
      %1469 = vmatprep.mubr.bf16.mxu0 0
      %1470 = vmatmul.mubr.bf16.gmra.mxu0 %v1411
      %v1471 = vpop.f32.mrf.mxu0
      %v1472 = vadd.f32 0.0, %v1471
      %v1473 = vpop.f32.mrf.mxu0
      %v1474 = vpop.f32.mrf.mxu0
      %v1475 = vadd.f32 0.0, %v1474
      %v1476 = vpop.f32.mrf.mxu0
      %1477 = vmatprep.mubr.bf16.mxu0 0
      %1478 = vmatmul.mubr.bf16.gmra.mxu0 %v1414
      %v1479 = vpop.f32.mrf.mxu0
      %v1480 = vadd.f32 0.0, %v1479
      %v1481 = vpop.f32.mrf.mxu0
      %v1482 = vpop.f32.mrf.mxu0
      %v1483 = vadd.f32 0.0, %v1482
      %v1484 = vpop.f32.mrf.mxu0
      %1485 = vmatprep.mubr.bf16.mxu0 0
      %1486 = vmatmul.mubr.bf16.gmra.mxu0 %v1417
      %v1487 = vpop.f32.mrf.mxu0
      %v1488 = vadd.f32 0.0, %v1487
      %v1489 = vpop.f32.mrf.mxu0
      %v1490 = vpop.f32.mrf.mxu0
      %v1491 = vadd.f32 0.0, %v1490
      %v1492 = vpop.f32.mrf.mxu0
      %1493 = vmatprep.mubr.bf16.mxu0 0
      %1494 = vmatmul.mubr.bf16.gmra.mxu0 %v1420
      %v1495 = vpop.f32.mrf.mxu0
      %v1496 = vadd.f32 0.0, %v1495
      %v1497 = vpop.f32.mrf.mxu0
      %v1498 = vpop.f32.mrf.mxu0
      %v1499 = vadd.f32 0.0, %v1498
      %v1500 = vpop.f32.mrf.mxu0
      %1501 = vmatprep.mubr.bf16.mxu0 0
      %1502 = vmatmul.mubr.bf16.gmra.mxu0 %v1423
      %v1503 = vpop.f32.mrf.mxu0
      %v1504 = vadd.f32 0.0, %v1503
      %v1505 = vpop.f32.mrf.mxu0
      %v1506 = vpop.f32.mrf.mxu0
      %v1507 = vadd.f32 0.0, %v1506
      %v1508 = vpop.f32.mrf.mxu0
      %1509 = vmatprep.mubr.bf16.mxu0 0
      %1510 = vmatmul.mubr.bf16.gmra.mxu0 %v1426
      %v1511 = vpop.f32.mrf.mxu0
      %v1512 = vadd.f32 0.0, %v1511
      %v1513 = vpop.f32.mrf.mxu0
      %v1514 = vpop.f32.mrf.mxu0
      %v1515 = vadd.f32 0.0, %v1514
      %v1516 = vpop.f32.mrf.mxu0
      %1517 = vmatprep.mubr.bf16.mxu0 0
      %1518 = vmatmul.mubr.bf16.gmra.mxu0 %v1429
      %v1519 = vpop.f32.mrf.mxu0
      %v1520 = vadd.f32 0.0, %v1519
      %v1521 = vpop.f32.mrf.mxu0
      %v1522 = vpop.f32.mrf.mxu0
      %v1523 = vadd.f32 0.0, %v1522
      %v1524 = vpop.f32.mrf.mxu0
      %1525 = vmatprep.mubr.bf16.mxu0 0
      %1526 = vmatmul.mubr.bf16.gmra.mxu0 %v1432
      %v1527 = vpop.f32.mrf.mxu0
      %v1528 = vadd.f32 0.0, %v1527
      %v1529 = vpop.f32.mrf.mxu0
      %v1530 = vpop.f32.mrf.mxu0
      %v1531 = vadd.f32 0.0, %v1530
      %v1532 = vpop.f32.mrf.mxu0
      %1533 = vdwg.mxu0
      %v1534 = vadd.f32 %v1335, %v1472
      %v1535 = vadd.f32 %v1336, %v1475
      %v1536 = vadd.f32 %v1337, %v1480
      %v1537 = vadd.f32 %v1338, %v1483
      %v1538 = vadd.f32 %v1339, %v1488
      %v1539 = vadd.f32 %v1340, %v1491
      %v1540 = vadd.f32 %v1341, %v1496
      %v1541 = vadd.f32 %v1342, %v1499
      %v1542 = vadd.f32 %v1343, %v1504
      %v1543 = vadd.f32 %v1344, %v1507
      %v1544 = vadd.f32 %v1345, %v1512
      %v1545 = vadd.f32 %v1346, %v1515
      %v1546 = vadd.f32 %v1347, %v1520
      %v1547 = vadd.f32 %v1348, %v1523
      %v1548 = vadd.f32 %v1349, %v1528
      %v1549 = vadd.f32 %v1350, %v1531
      %v1550 = vld [vmem:[%s1351 + $0x8] sm:$0xf]
      %v1551 = vld [vmem:[%s1351 + $0xc] sm:$0xf]
      %v1552 = vld [vmem:[%s1351 + $0x10] sm:$0xf]
      %v1553 = vld [vmem:[%s1351 + $0x14] sm:$0xf]
      %v1554 = vld [vmem:[%s1351 + $0x18] sm:$0xf]
      %v1555 = vld [vmem:[%s1351 + $0x1c] sm:$0xf]
      %v1556 = vld [vmem:[%s1351 + $0x20] sm:$0xf]
      %v1557 = vld [vmem:[%s1351 + $0x24] sm:$0xf]
      %v1558 = vld [vmem:[%s1351 + $0x28] sm:$0xf]
      %v1559 = vld [vmem:[%s1351 + $0x2c] sm:$0xf]
      %v1560 = vld [vmem:[%s1351 + $0x30] sm:$0xf]
      %v1561 = vld [vmem:[%s1351 + $0x34] sm:$0xf]
      %v1562 = vld [vmem:[%s1351 + $0x38] sm:$0xf]
      %v1563 = vld [vmem:[%s1351 + $0x3c] sm:$0xf]
      %v1564 = vld [vmem:[%s1351 + $0x40] sm:$0xf]
      %v1565 = vld [vmem:[%s1351 + $0x44] sm:$0xf]
      %s1566 = scalar_lea.vmem %s1, 28
      %v1567 = vld [vmem:[%s1566] sm:$0xf]
      %v1584 = vunpack.c.l.b16 %v1550
      %v1585 = vunpack.c.l.b16 %v1551
      %v1586 = vunpack.c.l.b16 %v1552
      %v1587 = vunpack.c.l.b16 %v1553
      %v1588 = vunpack.c.l.b16 %v1554
      %v1589 = vunpack.c.l.b16 %v1555
      %v1590 = vunpack.c.l.b16 %v1556
      %v1591 = vunpack.c.l.b16 %v1557
      %v1592 = vunpack.c.l.b16 %v1558
      %v1593 = vunpack.c.l.b16 %v1559
      %v1594 = vunpack.c.l.b16 %v1560
      %v1595 = vunpack.c.l.b16 %v1561
      %v1596 = vunpack.c.l.b16 %v1562
      %v1597 = vunpack.c.l.b16 %v1563
      %v1598 = vunpack.c.l.b16 %v1564
      %v1599 = vunpack.c.l.b16 %v1565
      %v1600 = vpack.c.b16 %v1585, %v1584
      %v1601 = vpack.c.b16 %v1587, %v1586
      %v1602 = vpack.c.b16 %v1589, %v1588
      %v1603 = vpack.c.b16 %v1591, %v1590
      %v1604 = vpack.c.b16 %v1593, %v1592
      %v1605 = vpack.c.b16 %v1595, %v1594
      %v1606 = vpack.c.b16 %v1597, %v1596
      %v1607 = vpack.c.b16 %v1599, %v1598
      %v1609 = vsel %vm324, %v1600, 0
      %v1612 = vsel %vm324, %v1601, 0
      %v1615 = vsel %vm324, %v1602, 0
      %v1618 = vsel %vm324, %v1603, 0
      %v1621 = vsel %vm324, %v1604, 0
      %v1624 = vsel %vm324, %v1605, 0
      %v1627 = vsel %vm324, %v1606, 0
      %v1630 = vsel %vm324, %v1607, 0
      %v1633 = vsel %vm349, %v1567, 0
      %1635 = vmatprep.subr.bf16.mxu0 0
      %1636 = vmatpush1.bf16.msra.mxu0 0
      %1637 = vmatprep.subr.bf16.mxu0 0
      %1638 = vmatpush1.bf16.msra.mxu0 0
      %1639 = vmatprep.subr.bf16.mxu0 0
      %1640 = vmatpush1.bf16.msra.mxu0 0
      %1641 = vmatprep.subr.bf16.mxu0 0
      %1642 = vmatpush1.bf16.msra.mxu0 0
      %1643 = vmatprep.subr.bf16.mxu0 0
      %1644 = vmatpush1.bf16.msra.mxu0 0
      %1645 = vmatprep.subr.bf16.mxu0 0
      %1646 = vmatpush1.bf16.msra.mxu0 0
      %1647 = vmatprep.subr.bf16.mxu0 0
      %1648 = vmatpush1.bf16.msra.mxu0 0
      %1649 = vmatprep.subr.bf16.mxu0 0
      %1650 = vmatpush1.bf16.msra.mxu0 %v1633
      %1651 = vmatprep.subr.bf16.mxu0 0
      %1652 = vmatpush2.bf16.msra.mxu0 0
      %1653 = vmatprep.subr.bf16.mxu0 0
      %1654 = vmatpush2.bf16.msra.mxu0 0
      %1655 = vmatprep.subr.bf16.mxu0 0
      %1656 = vmatpush2.bf16.msra.mxu0 0
      %1657 = vmatprep.subr.bf16.mxu0 0
      %1658 = vmatpush2.bf16.msra.mxu0 0
      %1659 = vmatprep.subr.bf16.mxu0 0
      %1660 = vmatpush2.bf16.msra.mxu0 0
      %1661 = vmatprep.subr.bf16.mxu0 0
      %1662 = vmatpush2.bf16.msra.mxu0 0
      %1663 = vmatprep.subr.bf16.mxu0 0
      %1664 = vmatpush2.bf16.msra.mxu0 0
      %1665 = vmatprep.subr.bf16.mxu0 0
      %1666 = vmatpush2.bf16.msra.mxu0 0
      %1667 = vmatprep.mubr.bf16.mxu0 0
      %1668 = vmatmul.mubr.bf16.gmra.mxu0 %v1609
      %v1669 = vpop.f32.mrf.mxu0
      %v1670 = vadd.f32 0.0, %v1669
      %v1671 = vpop.f32.mrf.mxu0
      %v1672 = vpop.f32.mrf.mxu0
      %v1673 = vadd.f32 0.0, %v1672
      %v1674 = vpop.f32.mrf.mxu0
      %1675 = vmatprep.mubr.bf16.mxu0 0
      %1676 = vmatmul.mubr.bf16.gmra.mxu0 %v1612
      %v1677 = vpop.f32.mrf.mxu0
      %v1678 = vadd.f32 0.0, %v1677
      %v1679 = vpop.f32.mrf.mxu0
      %v1680 = vpop.f32.mrf.mxu0
      %v1681 = vadd.f32 0.0, %v1680
      %v1682 = vpop.f32.mrf.mxu0
      %1683 = vmatprep.mubr.bf16.mxu0 0
      %1684 = vmatmul.mubr.bf16.gmra.mxu0 %v1615
      %v1685 = vpop.f32.mrf.mxu0
      %v1686 = vadd.f32 0.0, %v1685
      %v1687 = vpop.f32.mrf.mxu0
      %v1688 = vpop.f32.mrf.mxu0
      %v1689 = vadd.f32 0.0, %v1688
      %v1690 = vpop.f32.mrf.mxu0
      %1691 = vmatprep.mubr.bf16.mxu0 0
      %1692 = vmatmul.mubr.bf16.gmra.mxu0 %v1618
      %v1693 = vpop.f32.mrf.mxu0
      %v1694 = vadd.f32 0.0, %v1693
      %v1695 = vpop.f32.mrf.mxu0
      %v1696 = vpop.f32.mrf.mxu0
      %v1697 = vadd.f32 0.0, %v1696
      %v1698 = vpop.f32.mrf.mxu0
      %1699 = vmatprep.mubr.bf16.mxu0 0
      %1700 = vmatmul.mubr.bf16.gmra.mxu0 %v1621
      %v1701 = vpop.f32.mrf.mxu0
      %v1702 = vadd.f32 0.0, %v1701
      %v1703 = vpop.f32.mrf.mxu0
      %v1704 = vpop.f32.mrf.mxu0
      %v1705 = vadd.f32 0.0, %v1704
      %v1706 = vpop.f32.mrf.mxu0
      %1707 = vmatprep.mubr.bf16.mxu0 0
      %1708 = vmatmul.mubr.bf16.gmra.mxu0 %v1624
      %v1709 = vpop.f32.mrf.mxu0
      %v1710 = vadd.f32 0.0, %v1709
      %v1711 = vpop.f32.mrf.mxu0
      %v1712 = vpop.f32.mrf.mxu0
      %v1713 = vadd.f32 0.0, %v1712
      %v1714 = vpop.f32.mrf.mxu0
      %1715 = vmatprep.mubr.bf16.mxu0 0
      %1716 = vmatmul.mubr.bf16.gmra.mxu0 %v1627
      %v1717 = vpop.f32.mrf.mxu0
      %v1718 = vadd.f32 0.0, %v1717
      %v1719 = vpop.f32.mrf.mxu0
      %v1720 = vpop.f32.mrf.mxu0
      %v1721 = vadd.f32 0.0, %v1720
      %v1722 = vpop.f32.mrf.mxu0
      %1723 = vmatprep.mubr.bf16.mxu0 0
      %1724 = vmatmul.mubr.bf16.gmra.mxu0 %v1630
      %v1725 = vpop.f32.mrf.mxu0
      %v1726 = vadd.f32 0.0, %v1725
      %v1727 = vpop.f32.mrf.mxu0
      %v1728 = vpop.f32.mrf.mxu0
      %v1729 = vadd.f32 0.0, %v1728
      %v1730 = vpop.f32.mrf.mxu0
      %1731 = vdwg.mxu0
      %v1732 = vadd.f32 %v1534, %v1670
      %v1733 = vadd.f32 %v1535, %v1673
      %v1734 = vadd.f32 %v1536, %v1678
      %v1735 = vadd.f32 %v1537, %v1681
      %v1736 = vadd.f32 %v1538, %v1686
      %v1737 = vadd.f32 %v1539, %v1689
      %v1738 = vadd.f32 %v1540, %v1694
      %v1739 = vadd.f32 %v1541, %v1697
      %v1740 = vadd.f32 %v1542, %v1702
      %v1741 = vadd.f32 %v1543, %v1705
      %v1742 = vadd.f32 %v1544, %v1710
      %v1743 = vadd.f32 %v1545, %v1713
      %v1744 = vadd.f32 %v1546, %v1718
      %v1745 = vadd.f32 %v1547, %v1721
      %v1746 = vadd.f32 %v1548, %v1726
      %v1747 = vadd.f32 %v1549, %v1729
      %v1748 = vld [vmem:[%s1351 + $0x10] sm:$0xf]
      %v1749 = vld [vmem:[%s1351 + $0x14] sm:$0xf]
      %v1750 = vld [vmem:[%s1351 + $0x18] sm:$0xf]
      %v1751 = vld [vmem:[%s1351 + $0x1c] sm:$0xf]
      %v1752 = vld [vmem:[%s1351 + $0x20] sm:$0xf]
      %v1753 = vld [vmem:[%s1351 + $0x24] sm:$0xf]
      %v1754 = vld [vmem:[%s1351 + $0x28] sm:$0xf]
      %v1755 = vld [vmem:[%s1351 + $0x2c] sm:$0xf]
      %v1756 = vld [vmem:[%s1351 + $0x30] sm:$0xf]
      %v1757 = vld [vmem:[%s1351 + $0x34] sm:$0xf]
      %v1758 = vld [vmem:[%s1351 + $0x38] sm:$0xf]
      %v1759 = vld [vmem:[%s1351 + $0x3c] sm:$0xf]
      %v1760 = vld [vmem:[%s1351 + $0x40] sm:$0xf]
      %v1761 = vld [vmem:[%s1351 + $0x44] sm:$0xf]
      %v1762 = vld [vmem:[%s1351 + $0x48] sm:$0xf]
      %v1763 = vld [vmem:[%s1351 + $0x4c] sm:$0xf]
      %s1764 = scalar_lea.vmem %s1, 32
      %v1765 = vld [vmem:[%s1764] sm:$0xf]
      %v1782 = vunpack.c.l.b16 %v1748
      %v1783 = vunpack.c.l.b16 %v1749
      %v1784 = vunpack.c.l.b16 %v1750
      %v1785 = vunpack.c.l.b16 %v1751
      %v1786 = vunpack.c.l.b16 %v1752
      %v1787 = vunpack.c.l.b16 %v1753
      %v1788 = vunpack.c.l.b16 %v1754
      %v1789 = vunpack.c.l.b16 %v1755
      %v1790 = vunpack.c.l.b16 %v1756
      %v1791 = vunpack.c.l.b16 %v1757
      %v1792 = vunpack.c.l.b16 %v1758
      %v1793 = vunpack.c.l.b16 %v1759
      %v1794 = vunpack.c.l.b16 %v1760
      %v1795 = vunpack.c.l.b16 %v1761
      %v1796 = vunpack.c.l.b16 %v1762
      %v1797 = vunpack.c.l.b16 %v1763
      %v1798 = vpack.c.b16 %v1783, %v1782
      %v1799 = vpack.c.b16 %v1785, %v1784
      %v1800 = vpack.c.b16 %v1787, %v1786
      %v1801 = vpack.c.b16 %v1789, %v1788
      %v1802 = vpack.c.b16 %v1791, %v1790
      %v1803 = vpack.c.b16 %v1793, %v1792
      %v1804 = vpack.c.b16 %v1795, %v1794
      %v1805 = vpack.c.b16 %v1797, %v1796
      %v1807 = vsel %vm324, %v1798, 0
      %v1810 = vsel %vm324, %v1799, 0
      %v1813 = vsel %vm324, %v1800, 0
      %v1816 = vsel %vm324, %v1801, 0
      %v1819 = vsel %vm324, %v1802, 0
      %v1822 = vsel %vm324, %v1803, 0
      %v1825 = vsel %vm324, %v1804, 0
      %v1828 = vsel %vm324, %v1805, 0
      %v1831 = vsel %vm349, %v1765, 0
      %1833 = vmatprep.subr.bf16.mxu0 0
      %1834 = vmatpush1.bf16.msra.mxu0 0
      %1835 = vmatprep.subr.bf16.mxu0 0
      %1836 = vmatpush1.bf16.msra.mxu0 0
      %1837 = vmatprep.subr.bf16.mxu0 0
      %1838 = vmatpush1.bf16.msra.mxu0 0
      %1839 = vmatprep.subr.bf16.mxu0 0
      %1840 = vmatpush1.bf16.msra.mxu0 0
      %1841 = vmatprep.subr.bf16.mxu0 0
      %1842 = vmatpush1.bf16.msra.mxu0 0
      %1843 = vmatprep.subr.bf16.mxu0 0
      %1844 = vmatpush1.bf16.msra.mxu0 0
      %1845 = vmatprep.subr.bf16.mxu0 0
      %1846 = vmatpush1.bf16.msra.mxu0 0
      %1847 = vmatprep.subr.bf16.mxu0 0
      %1848 = vmatpush1.bf16.msra.mxu0 %v1831
      %1849 = vmatprep.subr.bf16.mxu0 0
      %1850 = vmatpush2.bf16.msra.mxu0 0
      %1851 = vmatprep.subr.bf16.mxu0 0
      %1852 = vmatpush2.bf16.msra.mxu0 0
      %1853 = vmatprep.subr.bf16.mxu0 0
      %1854 = vmatpush2.bf16.msra.mxu0 0
      %1855 = vmatprep.subr.bf16.mxu0 0
      %1856 = vmatpush2.bf16.msra.mxu0 0
      %1857 = vmatprep.subr.bf16.mxu0 0
      %1858 = vmatpush2.bf16.msra.mxu0 0
      %1859 = vmatprep.subr.bf16.mxu0 0
      %1860 = vmatpush2.bf16.msra.mxu0 0
      %1861 = vmatprep.subr.bf16.mxu0 0
      %1862 = vmatpush2.bf16.msra.mxu0 0
      %1863 = vmatprep.subr.bf16.mxu0 0
      %1864 = vmatpush2.bf16.msra.mxu0 0
      %1865 = vmatprep.mubr.bf16.mxu0 0
      %1866 = vmatmul.mubr.bf16.gmra.mxu0 %v1807
      %v1867 = vpop.f32.mrf.mxu0
      %v1868 = vadd.f32 0.0, %v1867
      %v1869 = vpop.f32.mrf.mxu0
      %v1870 = vpop.f32.mrf.mxu0
      %v1871 = vadd.f32 0.0, %v1870
      %v1872 = vpop.f32.mrf.mxu0
      %1873 = vmatprep.mubr.bf16.mxu0 0
      %1874 = vmatmul.mubr.bf16.gmra.mxu0 %v1810
      %v1875 = vpop.f32.mrf.mxu0
      %v1876 = vadd.f32 0.0, %v1875
      %v1877 = vpop.f32.mrf.mxu0
      %v1878 = vpop.f32.mrf.mxu0
      %v1879 = vadd.f32 0.0, %v1878
      %v1880 = vpop.f32.mrf.mxu0
      %1881 = vmatprep.mubr.bf16.mxu0 0
      %1882 = vmatmul.mubr.bf16.gmra.mxu0 %v1813
      %v1883 = vpop.f32.mrf.mxu0
      %v1884 = vadd.f32 0.0, %v1883
      %v1885 = vpop.f32.mrf.mxu0
      %v1886 = vpop.f32.mrf.mxu0
      %v1887 = vadd.f32 0.0, %v1886
      %v1888 = vpop.f32.mrf.mxu0
      %1889 = vmatprep.mubr.bf16.mxu0 0
      %1890 = vmatmul.mubr.bf16.gmra.mxu0 %v1816
      %v1891 = vpop.f32.mrf.mxu0
      %v1892 = vadd.f32 0.0, %v1891
      %v1893 = vpop.f32.mrf.mxu0
      %v1894 = vpop.f32.mrf.mxu0
      %v1895 = vadd.f32 0.0, %v1894
      %v1896 = vpop.f32.mrf.mxu0
      %1897 = vmatprep.mubr.bf16.mxu0 0
      %1898 = vmatmul.mubr.bf16.gmra.mxu0 %v1819
      %v1899 = vpop.f32.mrf.mxu0
      %v1900 = vadd.f32 0.0, %v1899
      %v1901 = vpop.f32.mrf.mxu0
      %v1902 = vpop.f32.mrf.mxu0
      %v1903 = vadd.f32 0.0, %v1902
      %v1904 = vpop.f32.mrf.mxu0
      %1905 = vmatprep.mubr.bf16.mxu0 0
      %1906 = vmatmul.mubr.bf16.gmra.mxu0 %v1822
      %v1907 = vpop.f32.mrf.mxu0
      %v1908 = vadd.f32 0.0, %v1907
      %v1909 = vpop.f32.mrf.mxu0
      %v1910 = vpop.f32.mrf.mxu0
      %v1911 = vadd.f32 0.0, %v1910
      %v1912 = vpop.f32.mrf.mxu0
      %1913 = vmatprep.mubr.bf16.mxu0 0
      %1914 = vmatmul.mubr.bf16.gmra.mxu0 %v1825
      %v1915 = vpop.f32.mrf.mxu0
      %v1916 = vadd.f32 0.0, %v1915
      %v1917 = vpop.f32.mrf.mxu0
      %v1918 = vpop.f32.mrf.mxu0
      %v1919 = vadd.f32 0.0, %v1918
      %v1920 = vpop.f32.mrf.mxu0
      %1921 = vmatprep.mubr.bf16.mxu0 0
      %1922 = vmatmul.mubr.bf16.gmra.mxu0 %v1828
      %v1923 = vpop.f32.mrf.mxu0
      %v1924 = vadd.f32 0.0, %v1923
      %v1925 = vpop.f32.mrf.mxu0
      %v1926 = vpop.f32.mrf.mxu0
      %v1927 = vadd.f32 0.0, %v1926
      %v1928 = vpop.f32.mrf.mxu0
      %1929 = vdwg.mxu0
      %v1930 = vadd.f32 %v1732, %v1868
      %v1931 = vadd.f32 %v1733, %v1871
      %v1932 = vadd.f32 %v1734, %v1876
      %v1933 = vadd.f32 %v1735, %v1879
      %v1934 = vadd.f32 %v1736, %v1884
      %v1935 = vadd.f32 %v1737, %v1887
      %v1936 = vadd.f32 %v1738, %v1892
      %v1937 = vadd.f32 %v1739, %v1895
      %v1938 = vadd.f32 %v1740, %v1900
      %v1939 = vadd.f32 %v1741, %v1903
      %v1940 = vadd.f32 %v1742, %v1908
      %v1941 = vadd.f32 %v1743, %v1911
      %v1942 = vadd.f32 %v1744, %v1916
      %v1943 = vadd.f32 %v1745, %v1919
      %v1944 = vadd.f32 %v1746, %v1924
      %v1945 = vadd.f32 %v1747, %v1927
      %v1946 = vld [vmem:[%s2] sm:$0x1]
      %v1948 = vlaneseq
      %v1949 = vshrl.u32 %v1948, 7
      %v1950 = vsub.s32 0, %v1949
      %v1951 = vrot.slane %v1946, %v1950
      %v1953 = vadd.f32 %v1930, %v1951
      %v1954 = vadd.f32 %v1931, %v1951
      %v1955 = vadd.f32 %v1932, %v1951
      %v1956 = vadd.f32 %v1933, %v1951
      %v1957 = vadd.f32 %v1934, %v1951
      %v1958 = vadd.f32 %v1935, %v1951
      %v1959 = vadd.f32 %v1936, %v1951
      %v1960 = vadd.f32 %v1937, %v1951
      %v1961 = vadd.f32 %v1938, %v1951
      %v1962 = vadd.f32 %v1939, %v1951
      %v1963 = vadd.f32 %v1940, %v1951
      %v1964 = vadd.f32 %v1941, %v1951
      %v1965 = vadd.f32 %v1942, %v1951
      %v1966 = vadd.f32 %v1943, %v1951
      %v1967 = vadd.f32 %v1944, %v1951
      %v1968 = vadd.f32 %v1945, %v1951
      %vm1969 = vcmp.gt.f32.partialorder %v1953, 0.0
      %vm1970 = vcmp.gt.f32.partialorder %v1954, 0.0
      %vm1971 = vcmp.gt.f32.partialorder %v1955, 0.0
      %vm1972 = vcmp.gt.f32.partialorder %v1956, 0.0
      %vm1973 = vcmp.gt.f32.partialorder %v1957, 0.0
      %vm1974 = vcmp.gt.f32.partialorder %v1958, 0.0
      %vm1975 = vcmp.gt.f32.partialorder %v1959, 0.0
      %vm1976 = vcmp.gt.f32.partialorder %v1960, 0.0
      %vm1977 = vcmp.gt.f32.partialorder %v1961, 0.0
      %vm1978 = vcmp.gt.f32.partialorder %v1962, 0.0
      %vm1979 = vcmp.gt.f32.partialorder %v1963, 0.0
      %vm1980 = vcmp.gt.f32.partialorder %v1964, 0.0
      %vm1981 = vcmp.gt.f32.partialorder %v1965, 0.0
      %vm1982 = vcmp.gt.f32.partialorder %v1966, 0.0
      %vm1983 = vcmp.gt.f32.partialorder %v1967, 0.0
      %vm1984 = vcmp.gt.f32.partialorder %v1968, 0.0
      %v1985 = vmul.f32 %v1953, 0.01
      %v1986 = vmul.f32 %v1954, 0.01
      %v1987 = vmul.f32 %v1955, 0.01
      %v1988 = vmul.f32 %v1956, 0.01
      %v1989 = vmul.f32 %v1957, 0.01
      %v1990 = vmul.f32 %v1958, 0.01
      %v1991 = vmul.f32 %v1959, 0.01
      %v1992 = vmul.f32 %v1960, 0.01
      %v1993 = vmul.f32 %v1961, 0.01
      %v1994 = vmul.f32 %v1962, 0.01
      %v1995 = vmul.f32 %v1963, 0.01
      %v1996 = vmul.f32 %v1964, 0.01
      %v1997 = vmul.f32 %v1965, 0.01
      %v1998 = vmul.f32 %v1966, 0.01
      %v1999 = vmul.f32 %v1967, 0.01
      %v2000 = vmul.f32 %v1968, 0.01
      %v2001 = vsel %vm1969, %v1953, %v1985
      %v2002 = vsel %vm1970, %v1954, %v1986
      %v2003 = vsel %vm1971, %v1955, %v1987
      %v2004 = vsel %vm1972, %v1956, %v1988
      %v2005 = vsel %vm1973, %v1957, %v1989
      %v2006 = vsel %vm1974, %v1958, %v1990
      %v2007 = vsel %vm1975, %v1959, %v1991
      %v2008 = vsel %vm1976, %v1960, %v1992
      %v2009 = vsel %vm1977, %v1961, %v1993
      %v2010 = vsel %vm1978, %v1962, %v1994
      %v2011 = vsel %vm1979, %v1963, %v1995
      %v2012 = vsel %vm1980, %v1964, %v1996
      %v2013 = vsel %vm1981, %v1965, %v1997
      %v2014 = vsel %vm1982, %v1966, %v1998
      %v2015 = vsel %vm1983, %v1967, %v1999
      %v2016 = vsel %vm1984, %v1968, %v2000
      %v2017 = vpack.c.bf16 %v2002, %v2001
      %v2018 = vpack.c.bf16 %v2004, %v2003
      %v2019 = vpack.c.bf16 %v2006, %v2005
      %v2020 = vpack.c.bf16 %v2008, %v2007
      %v2021 = vpack.c.bf16 %v2010, %v2009
      %v2022 = vpack.c.bf16 %v2012, %v2011
      %v2023 = vpack.c.bf16 %v2014, %v2013
      %v2024 = vpack.c.bf16 %v2016, %v2015
      %v2025 = vld [vmem:[%s3] sm:$0xf]
      %v2026 = vld [vmem:[%s3 + $0x4] sm:$0xf]
      %v2027 = vld [vmem:[%s3 + $0x8] sm:$0xf]
      %v2028 = vld [vmem:[%s3 + $0xc] sm:$0xf]
      %v2029 = vld [vmem:[%s4] sm:$0x1]
      %v2031 = vlaneseq
      %v2032 = vshrl.u32 %v2031, 7
      %v2033 = vsub.s32 0, %v2032
      %v2034 = vrot.slane %v2029, %v2033
      %v2040 = vunpack.c.l.b16 %v2025
      %v2041 = vunpack.c.l.b16 %v2026
      %v2042 = vunpack.c.l.b16 %v2027
      %v2043 = vunpack.c.l.b16 %v2028
      %v2044 = vpack.c.b16 %v2041, %v2040
      %v2045 = vpack.c.b16 %v2043, %v2042
      %vm2048 = vcmask 261120
      %v2050 = vsel %vm2048, %v2017, 0
      %v2053 = vsel %vm2048, %v2018, 0
      %v2056 = vsel %vm2048, %v2019, 0
      %v2059 = vsel %vm2048, %v2020, 0
      %v2062 = vsel %vm2048, %v2021, 0
      %v2065 = vsel %vm2048, %v2022, 0
      %v2068 = vsel %vm2048, %v2023, 0
      %v2071 = vsel %vm2048, %v2024, 0
      %2073 = vmatprep.subr.bf16.mxu0 0
      %2074 = vmatpush1.bf16.msra.mxu0 0
      %2075 = vmatprep.subr.bf16.mxu0 0
      %2076 = vmatpush1.bf16.msra.mxu0 0
      %2077 = vmatprep.subr.bf16.mxu0 0
      %2078 = vmatpush1.bf16.msra.mxu0 0
      %2079 = vmatprep.subr.bf16.mxu0 0
      %2080 = vmatpush1.bf16.msra.mxu0 0
      %2081 = vmatprep.subr.bf16.mxu0 0
      %2082 = vmatpush1.bf16.msra.mxu0 0
      %2083 = vmatprep.subr.bf16.mxu0 0
      %2084 = vmatpush1.bf16.msra.mxu0 0
      %2085 = vmatprep.subr.bf16.mxu0 0
      %2086 = vmatpush1.bf16.msra.mxu0 %v2045
      %2087 = vmatprep.subr.bf16.mxu0 0
      %2088 = vmatpush1.bf16.msra.mxu0 %v2044
      %2089 = vmatprep.subr.bf16.mxu0 0
      %2090 = vmatpush2.bf16.msra.mxu0 0
      %2091 = vmatprep.subr.bf16.mxu0 0
      %2092 = vmatpush2.bf16.msra.mxu0 0
      %2093 = vmatprep.subr.bf16.mxu0 0
      %2094 = vmatpush2.bf16.msra.mxu0 0
      %2095 = vmatprep.subr.bf16.mxu0 0
      %2096 = vmatpush2.bf16.msra.mxu0 0
      %2097 = vmatprep.subr.bf16.mxu0 0
      %2098 = vmatpush2.bf16.msra.mxu0 0
      %2099 = vmatprep.subr.bf16.mxu0 0
      %2100 = vmatpush2.bf16.msra.mxu0 0
      %2101 = vmatprep.subr.bf16.mxu0 0
      %2102 = vmatpush2.bf16.msra.mxu0 0
      %2103 = vmatprep.subr.bf16.mxu0 0
      %2104 = vmatpush2.bf16.msra.mxu0 0
      %2105 = vmatprep.mubr.bf16.mxu0 0
      %2106 = vmatmul.mubr.bf16.gmra.mxu0 %v2050
      %v2107 = vpop.f32.mrf.mxu0
      %v2108 = vadd.f32 %v2034, %v2107
      %v2109 = vpop.f32.mrf.mxu0
      %v2110 = vpop.f32.mrf.mxu0
      %v2111 = vadd.f32 %v2034, %v2110
      %v2112 = vpop.f32.mrf.mxu0
      %2113 = vmatprep.mubr.bf16.mxu0 0
      %2114 = vmatmul.mubr.bf16.gmra.mxu0 %v2053
      %v2115 = vpop.f32.mrf.mxu0
      %v2116 = vadd.f32 %v2034, %v2115
      %v2117 = vpop.f32.mrf.mxu0
      %v2118 = vpop.f32.mrf.mxu0
      %v2119 = vadd.f32 %v2034, %v2118
      %v2120 = vpop.f32.mrf.mxu0
      %2121 = vmatprep.mubr.bf16.mxu0 0
      %2122 = vmatmul.mubr.bf16.gmra.mxu0 %v2056
      %v2123 = vpop.f32.mrf.mxu0
      %v2124 = vadd.f32 %v2034, %v2123
      %v2125 = vpop.f32.mrf.mxu0
      %v2126 = vpop.f32.mrf.mxu0
      %v2127 = vadd.f32 %v2034, %v2126
      %v2128 = vpop.f32.mrf.mxu0
      %2129 = vmatprep.mubr.bf16.mxu0 0
      %2130 = vmatmul.mubr.bf16.gmra.mxu0 %v2059
      %v2131 = vpop.f32.mrf.mxu0
      %v2132 = vadd.f32 %v2034, %v2131
      %v2133 = vpop.f32.mrf.mxu0
      %v2134 = vpop.f32.mrf.mxu0
      %v2135 = vadd.f32 %v2034, %v2134
      %v2136 = vpop.f32.mrf.mxu0
      %2137 = vmatprep.mubr.bf16.mxu0 0
      %2138 = vmatmul.mubr.bf16.gmra.mxu0 %v2062
      %v2139 = vpop.f32.mrf.mxu0
      %v2140 = vadd.f32 %v2034, %v2139
      %v2141 = vpop.f32.mrf.mxu0
      %v2142 = vpop.f32.mrf.mxu0
      %v2143 = vadd.f32 %v2034, %v2142
      %v2144 = vpop.f32.mrf.mxu0
      %2145 = vmatprep.mubr.bf16.mxu0 0
      %2146 = vmatmul.mubr.bf16.gmra.mxu0 %v2065
      %v2147 = vpop.f32.mrf.mxu0
      %v2148 = vadd.f32 %v2034, %v2147
      %v2149 = vpop.f32.mrf.mxu0
      %v2150 = vpop.f32.mrf.mxu0
      %v2151 = vadd.f32 %v2034, %v2150
      %v2152 = vpop.f32.mrf.mxu0
      %2153 = vmatprep.mubr.bf16.mxu0 0
      %2154 = vmatmul.mubr.bf16.gmra.mxu0 %v2068
      %v2155 = vpop.f32.mrf.mxu0
      %v2156 = vadd.f32 %v2034, %v2155
      %v2157 = vpop.f32.mrf.mxu0
      %v2158 = vpop.f32.mrf.mxu0
      %v2159 = vadd.f32 %v2034, %v2158
      %v2160 = vpop.f32.mrf.mxu0
      %2161 = vmatprep.mubr.bf16.mxu0 0
      %2162 = vmatmul.mubr.bf16.gmra.mxu0 %v2071
      %v2163 = vpop.f32.mrf.mxu0
      %v2164 = vadd.f32 %v2034, %v2163
      %v2165 = vpop.f32.mrf.mxu0
      %v2166 = vpop.f32.mrf.mxu0
      %v2167 = vadd.f32 %v2034, %v2166
      %v2168 = vpop.f32.mrf.mxu0
      %2169 = vdwg.mxu0
      %2170 = vst [vmem:[%s260] sm:$0xff] %v2108
      %2171 = vst [vmem:[%s260 + $0x8] sm:$0xff] %v2111
      %2172 = vst [vmem:[%s260 + $0x10] sm:$0xff] %v2116
      %2173 = vst [vmem:[%s260 + $0x18] sm:$0xff] %v2119
      %2174 = vst [vmem:[%s260 + $0x20] sm:$0xff] %v2124
      %2175 = vst [vmem:[%s260 + $0x28] sm:$0xff] %v2127
      %2176 = vst [vmem:[%s260 + $0x30] sm:$0xff] %v2132
      %2177 = vst [vmem:[%s260 + $0x38] sm:$0xff] %v2135
      %2178 = vst [vmem:[%s260 + $0x40] sm:$0xff] %v2140
      %2179 = vst [vmem:[%s260 + $0x48] sm:$0xff] %v2143
      %2180 = vst [vmem:[%s260 + $0x50] sm:$0xff] %v2148
      %2181 = vst [vmem:[%s260 + $0x58] sm:$0xff] %v2151
      %2182 = vst [vmem:[%s260 + $0x60] sm:$0xff] %v2156
      %2183 = vst [vmem:[%s260 + $0x68] sm:$0xff] %v2159
      %2184 = vst [vmem:[%s260 + $0x70] sm:$0xff] %v2164
      %2185 = vst [vmem:[%s260 + $0x78] sm:$0xff] %v2167
      %s2186 = smul.u32 16, %s21
      %p2187 = scmp.lt.s32.totalorder %s20, 1
      %s2188 = scalar_select %p2187, %s20, 1
      %p2189 = scmp.lt.s32.totalorder %s2186, 31
      %s2190 = scalar_select %p2189, %s2186, 31
      %s2191 = smul.addr %s2188, 32
      %s2192 = sadd.s32 %s2190, %s2191
      %s2193 = smul.addr %s2192, 8
      %s2194 = scalar_lea.vmem %s5, %s2193
      // Predicated region
      $region41: #{rpn_head_forward.1} parent=39 // pred_check
        %p2195 = pneg %p160
      $region42: #{rpn_head_forward.1} parent=39 // pred_check_branch
        %2197 = sbr.rel (%p2195) target = $region44
      $region43: #{rpn_head_forward.1} parent=39 // pred_region
        %s2198 = smul.u32 16, %s21
      $region44: #{rpn_head_forward.1} parent=39 // pred_fallthru
        _
    $region40: #{rpn_head_forward.1} parent=5 // pred_fallthru
      _
    %p2199 = scmp.le.s32.totalorder 2, %s11
    // Predicated region
    $region45: #{rpn_head_forward.1} parent=5 // pred_check
      %p2200 = pneg %p2199
    $region46: #{rpn_head_forward.1} parent=5 // pred_check_branch
      %2202 = sbr.rel (%p2200) target = $region48
    $region47: #{rpn_head_forward.1} parent=5 // pred_region
      %s2203 = ssub.s32 %s11, 2
      // Predicated region
      $region49: #{rpn_head_forward.1} parent=47 // pred_check
        %p2204 = pneg %p166
      $region50: #{rpn_head_forward.1} parent=47 // pred_check_branch
        %2206 = sbr.rel (%p2204) target = $region52
      $region51: #{rpn_head_forward.1} parent=47 // pred_region
        %s2207 = smul.u32 16, %s23
        %p2208 = scmp.lt.s32.totalorder %s22, 1
        %s2209 = scalar_select %p2208, %s22, 1
        %p2210 = scmp.lt.s32.totalorder %s2207, 31
        %s2211 = scalar_select %p2210, %s2207, 31
        %s2212 = smul.addr %s2209, 32
        %s2213 = sadd.s32 %s2211, %s2212
        %s2214 = smul.addr %s2213, 8
        %s2215 = scalar_lea.vmem %s5, %s2214
      $region52: #{rpn_head_forward.1} parent=47 // pred_fallthru
        _
    $region48: #{rpn_head_forward.1} parent=5 // pred_fallthru
      _
  $region6: #{rpn_head_forward.1} parent=0 // loop_footer
    %s15 = sadd.s32 1, %s11
  $region7: #{rpn_head_forward.1} parent=0 // loop_footer_branch
    %10 = sbr.rel target = $region3
  $region8: #{rpn_head_forward.1} parent=0 // loop_exit
    _

</llo_original>
